<compile_context>
chip_gen: v6e
topology: v6e:2x2x1
jax: 0.10.0
libtpu: 0.0.40
codegen_flags: <defaults>
</compile_context>

<pallas_src>
import math
import functools

import jax
import jax.numpy as jnp
from jax.experimental import pallas as pl
from jax.experimental.pallas import tpu as pltpu


def reading_seq_kernel(x_ref, gate_ref, rmask_ref, mh0_ref, mc0_ref,
                       wpx_ref, wpm_ref, bp_ref, wih_ref, whh_ref, b_ref,
                       h_out, attn_out, mh_out, mc_out, *, nout, nslots):
    t = pl.program_id(0)

    # Memory state lives in the VMEM-resident output blocks (constant block index
    # across the time grid); seed them from the inputs at t == 0.  Outputs are
    # aliased onto the inputs, so the recurrent state never bounces through HBM.
    @pl.when(t == 0)
    def _():
        mh_out[...] = mh0_ref[...]
        mc_out[...] = mc0_ref[...]

    x = x_ref[0]                  # (B, ninp)
    gate = gate_ref[0]            # (B, S)
    rmask = rmask_ref[...]        # (B, N)
    mh = mh_out[...]              # (B, S, N)  current memory state
    mc = mc_out[...]              # (B, S, N)

    # ---- attention ---------------------------------------------------------
    # projector_summ (dropouts are identity at inference).  Concat -> split dots;
    # the 1/sqrt(nout) logit scale is already folded into wp/bp.
    key = (jnp.dot(x, wpx_ref[...], preferred_element_type=jnp.float32)
           + jnp.dot(mh[:, 0, :], wpm_ref[...], preferred_element_type=jnp.float32)
           + bp_ref[...])                                        # (B, N), pre-scaled

    logits = jnp.sum(mh * key[:, None, :], axis=-1)              # (B, S)

    # TODO(synk): `softmax(logits, gate)` is undefined in the provided source;
    # implemented as the gate-reweighted, renormalized softmax (PRPN convention).
    m = jnp.max(logits, axis=-1, keepdims=True)
    e = jnp.exp(logits - m) * gate
    inv = pl.reciprocal(jnp.sum(e, axis=-1, keepdims=True) + 1e-9, approx=True)
    attn = e * inv                                               # (B, S)

    sel_h = jnp.sum(mh * attn[:, :, None], axis=1)               # (B, N)
    sel_c = jnp.sum(mc * attn[:, :, None], axis=1)               # (B, N)

    # ---- LSTM cell (gates i, f, g, o); bias b = b_ih + b_hh pre-summed ------
    hx = sel_h * rmask
    gates = (jnp.dot(x, wih_ref[...], preferred_element_type=jnp.float32)
             + jnp.dot(hx, whh_ref[...], preferred_element_type=jnp.float32)
             + b_ref[...])                                       # (B, 4N)
    i_g = jax.nn.sigmoid(gates[:, 0 * nout:1 * nout])
    f_g = jax.nn.sigmoid(gates[:, 1 * nout:2 * nout])
    g_g = jnp.tanh(gates[:, 2 * nout:3 * nout])
    o_g = jax.nn.sigmoid(gates[:, 3 * nout:4 * nout])
    c_i = f_g * sel_c + i_g * g_g
    h_i = o_g * jnp.tanh(c_i)

    h_out[0] = h_i
    attn_out[0] = attn

    # ---- memory shift: new slot 0 = (h_i, c_i), drop last slot --------------
    # Direct slice stores; no concatenate temp (mh/mc are already in vregs).
    mh_out[:, 1:, :] = mh[:, :nslots - 1, :]
    mc_out[:, 1:, :] = mc[:, :nslots - 1, :]
    mh_out[:, 0:1, :] = h_i[:, None, :]
    mc_out[:, 0:1, :] = c_i[:, None, :]


def _prepare_params(params, ninp, nout):
    """One-time weight transforms done in the wrapper (outside the kernel)."""
    w_proj, b_proj, w_ih, b_ih, w_hh, b_hh = params
    scale = 1.0 / math.sqrt(nout)
    wp_x = w_proj[:ninp] * scale          # (ninp, N), logit scale folded in
    wp_m = w_proj[ninp:] * scale          # (N, N)
    bp = b_proj * scale                   # (1, N)
    b = b_ih + b_hh                       # (1, 4N) fused LSTM bias
    return wp_x, wp_m, bp, w_ih, w_hh, b


@jax.jit
def reading_network_sequence(x_seq, memory_h, memory_c, gate_seq, rmask, params):
    """Run T ReadingNetwork forward steps in one fused Pallas kernel.

    Returns (h per step (T,B,N), attention per step (T,B,S),
             final memory_h (B,S,N), final memory_c (B,S,N)).
    """
    T, B, ninp = x_seq.shape
    _, S, N = memory_h.shape
    wp_x, wp_m, bp, w_ih, w_hh, b = _prepare_params(params, ninp, N)

    grid_spec = pltpu.PrefetchScalarGridSpec(
        num_scalar_prefetch=0,
        grid=(T,),
        in_specs=[
            pl.BlockSpec((1, B, ninp), lambda t: (t, 0, 0)),   # x_seq (per-step)
            pl.BlockSpec((1, B, S),    lambda t: (t, 0, 0)),   # gate_seq (per-step)
            pl.BlockSpec((B, N),       lambda t: (0, 0)),      # rmask     (resident)
            pl.BlockSpec((B, S, N),    lambda t: (0, 0, 0)),   # memory_h0 (resident)
            pl.BlockSpec((B, S, N),    lambda t: (0, 0, 0)),   # memory_c0 (resident)
            pl.BlockSpec((ninp, N),    lambda t: (0, 0)),      # wp_x
            pl.BlockSpec((N, N),       lambda t: (0, 0)),      # wp_m
            pl.BlockSpec((1, N),       lambda t: (0, 0)),      # bp
            pl.BlockSpec((ninp, 4 * N), lambda t: (0, 0)),     # w_ih
            pl.BlockSpec((N, 4 * N),   lambda t: (0, 0)),      # w_hh
            pl.BlockSpec((1, 4 * N),   lambda t: (0, 0)),      # b (= b_ih + b_hh)
        ],
        out_specs=(
            pl.BlockSpec((1, B, N), lambda t: (t, 0, 0)),      # h per step
            pl.BlockSpec((1, B, S), lambda t: (t, 0, 0)),      # attention per step
            pl.BlockSpec((B, S, N), lambda t: (0, 0, 0)),      # final memory_h (resident)
            pl.BlockSpec((B, S, N), lambda t: (0, 0, 0)),      # final memory_c (resident)
        ),
    )
    out_shape = (
        jax.ShapeDtypeStruct((T, B, N), jnp.float32),
        jax.ShapeDtypeStruct((T, B, S), jnp.float32),
        jax.ShapeDtypeStruct((B, S, N), jnp.float32),
        jax.ShapeDtypeStruct((B, S, N), jnp.float32),
    )
    fn = pl.pallas_call(
        functools.partial(reading_seq_kernel, nout=N, nslots=S),
        grid_spec=grid_spec,
        out_shape=out_shape,
        input_output_aliases={3: 2, 4: 3},   # memory_h/c inputs alias their outputs
        compiler_params=pltpu.CompilerParams(
            dimension_semantics=("arbitrary",)),   # time axis is a true recurrence
    )
    return fn(x_seq, gate_seq, rmask, memory_h, memory_c,
              wp_x, wp_m, bp, w_ih, w_hh, b)


def reading_network_step(x, memory, gate_time, rmask, params):
    """Single-step interface matching the PyTorch module forward exactly."""
    memory_h, memory_c = memory
    h_seq, attn_seq, mh, mc = reading_network_sequence(
        x[None], memory_h, memory_c, gate_time[None], rmask, params)
    return h_seq[0], (mh, mc), attn_seq[0]


def init_params(key, ninp, nout):
    """Deterministic PyTorch-style uniform init."""
    k = jax.random.split(key, 6)
    s_p = 1.0 / math.sqrt(ninp + nout)
    s_l = 1.0 / math.sqrt(nout)
    w_proj = jax.random.uniform(k[0], (ninp + nout, nout), jnp.float32, -s_p, s_p)
    b_proj = jax.random.uniform(k[1], (1, nout), jnp.float32, -s_p, s_p)
    w_ih = jax.random.uniform(k[2], (ninp, 4 * nout), jnp.float32, -s_l, s_l)
    b_ih = jax.random.uniform(k[3], (1, 4 * nout), jnp.float32, -s_l, s_l)
    w_hh = jax.random.uniform(k[4], (nout, 4 * nout), jnp.float32, -s_l, s_l)
    b_hh = jax.random.uniform(k[5], (1, 4 * nout), jnp.float32, -s_l, s_l)
    return (w_proj, b_proj, w_ih, b_ih, w_hh, b_hh)


def reference_step(x, mh, mc, gate, rmask, params, nout):
    """Pure-JAX reference of one module forward step (exact arithmetic)."""
    w_p, b_p, w_ih, b_ih, w_hh, b_hh = params
    key = jnp.concatenate([x, mh[:, 0, :]], axis=1) @ w_p + b_p
    logits = jnp.einsum('bsn,bn->bs', mh, key) / math.sqrt(nout)
    m = jnp.max(logits, axis=-1, keepdims=True)
    e = jnp.exp(logits - m) * gate
    attn = e / (jnp.sum(e, axis=-1, keepdims=True) + 1e-9)
    sel_h = jnp.einsum('bsn,bs->bn', mh, attn)
    sel_c = jnp.einsum('bsn,bs->bn', mc, attn)
    gates = x @ w_ih + b_ih + (sel_h * rmask) @ w_hh + b_hh
    i_g, f_g, g_g, o_g = jnp.split(gates, 4, axis=1)
    c_i = jax.nn.sigmoid(f_g) * sel_c + jax.nn.sigmoid(i_g) * jnp.tanh(g_g)
    h_i = jax.nn.sigmoid(o_g) * jnp.tanh(c_i)
    new_mh = jnp.concatenate([h_i[:, None, :], mh[:, :-1, :]], axis=1)
    new_mc = jnp.concatenate([c_i[:, None, :], mc[:, :-1, :]], axis=1)
    return h_i, new_mh, new_mc, attn


if __name__ == "__main__":
    B, ninp, nout, nslots, T = 2, 32, 32, 8, 8

    root = jax.random.PRNGKey(0)
    kp, kx, kh, kc, kg = jax.random.split(root, 5)

    params = init_params(kp, ninp, nout)
    x_seq = jax.random.normal(kx, (T, B, ninp), jnp.float32)
    memory_h = jax.random.normal(kh, (B, nslots, nout), jnp.float32) * 0.1
    memory_c = jax.random.normal(kc, (B, nslots, nout), jnp.float32) * 0.1
    gate_seq = jax.nn.sigmoid(jax.random.normal(kg, (T, B, nslots), jnp.float32))
    rmask = jnp.ones((B, nout), jnp.float32)   # dropout mask (identity at eval)

    # Fused multi-step kernel
    h_seq, attn_seq, mh_f, mc_f = jax.block_until_ready(
        reading_network_sequence(x_seq, memory_h, memory_c, gate_seq, rmask, params))

    # Pure-JAX reference: module forward applied step by step
    mh_r, mc_r = memory_h, memory_c
    h_ref, attn_ref = [], []
    for t in range(T):
        h_i, mh_r, mc_r, attn = reference_step(
            x_seq[t], mh_r, mc_r, gate_seq[t], rmask, params, nout)
        h_ref.append(h_i)
        attn_ref.append(attn)
    h_ref = jnp.stack(h_ref)
    attn_ref = jnp.stack(attn_ref)

    tol = dict(atol=2e-3, rtol=2e-3)   # pl.reciprocal(approx=True) in the softmax
    assert jnp.allclose(h_seq, h_ref, **tol), "h mismatch vs JAX reference"
    assert jnp.allclose(attn_seq, attn_ref, **tol), "attention mismatch vs JAX reference"
    assert jnp.allclose(mh_f, mh_r, **tol), "memory_h mismatch vs JAX reference"
    assert jnp.allclose(mc_f, mc_r, **tol), "memory_c mismatch vs JAX reference"

    # Single-step (module-forward) interface
    h1, (mh1, mc1), a1 = jax.block_until_ready(
        reading_network_step(x_seq[0], (memory_h, memory_c), gate_seq[0], rmask, params))
    h1_r, mh1_r, mc1_r, a1_r = reference_step(
        x_seq[0], memory_h, memory_c, gate_seq[0], rmask, params, nout)
    assert jnp.allclose(h1, h1_r, **tol)
    assert jnp.allclose(mh1, mh1_r, **tol)
    assert jnp.allclose(mc1, mc1_r, **tol)
    assert jnp.allclose(a1, a1_r, **tol)

    print("KERNEL_OK")
</pallas_src>

<mosaic_0001>
module attributes {stable_mosaic.version = 11 : i64} {
  func.func @reading_seq_kernel(%arg0: i32, %arg1: memref<1x2x32xf32, #tpu.memory_space<vmem>>, %arg2: memref<1x2x8xf32, #tpu.memory_space<vmem>>, %arg3: memref<2x32xf32, #tpu.memory_space<vmem>>, %arg4: memref<2x8x32xf32, #tpu.memory_space<vmem>>, %arg5: memref<2x8x32xf32, #tpu.memory_space<vmem>>, %arg6: memref<32x32xf32, #tpu.memory_space<vmem>>, %arg7: memref<32x32xf32, #tpu.memory_space<vmem>>, %arg8: memref<1x32xf32, #tpu.memory_space<vmem>>, %arg9: memref<32x128xf32, #tpu.memory_space<vmem>>, %arg10: memref<32x128xf32, #tpu.memory_space<vmem>>, %arg11: memref<1x128xf32, #tpu.memory_space<vmem>>, %arg12: memref<1x2x32xf32, #tpu.memory_space<vmem>>, %arg13: memref<1x2x8xf32, #tpu.memory_space<vmem>>, %arg14: memref<2x8x32xf32, #tpu.memory_space<vmem>>, %arg15: memref<2x8x32xf32, #tpu.memory_space<vmem>>) attributes {dimension_semantics = [#tpu.dimension_semantics<arbitrary>], iteration_bounds = array<i64: 8>, scalar_prefetch = 0 : i64, scratch_operands = 0 : i64, tpu.core_type = #tpu.core_type<tc>, window_params = [{transform_indices = @transform_0, window_bounds = array<i64: 1, 2, 32>}, {transform_indices = @transform_1, window_bounds = array<i64: 1, 2, 8>}, {pipeline_mode = #tpu.pipeline_mode<synchronous>, transform_indices = @transform_2, window_bounds = array<i64: 2, 32>}, {pipeline_mode = #tpu.pipeline_mode<synchronous>, transform_indices = @transform_3, window_bounds = array<i64: 2, 8, 32>}, {pipeline_mode = #tpu.pipeline_mode<synchronous>, transform_indices = @transform_4, window_bounds = array<i64: 2, 8, 32>}, {pipeline_mode = #tpu.pipeline_mode<synchronous>, transform_indices = @transform_5, window_bounds = array<i64: 32, 32>}, {pipeline_mode = #tpu.pipeline_mode<synchronous>, transform_indices = @transform_6, window_bounds = array<i64: 32, 32>}, {pipeline_mode = #tpu.pipeline_mode<synchronous>, transform_indices = @transform_7, window_bounds = array<i64: 1, 32>}, {pipeline_mode = #tpu.pipeline_mode<synchronous>, transform_indices = @transform_8, window_bounds = array<i64: 32, 128>}, {pipeline_mode = #tpu.pipeline_mode<synchronous>, transform_indices = @transform_9, window_bounds = array<i64: 32, 128>}, {pipeline_mode = #tpu.pipeline_mode<synchronous>, transform_indices = @transform_10, window_bounds = array<i64: 1, 128>}, {transform_indices = @transform_11, window_bounds = array<i64: 1, 2, 32>}, {transform_indices = @transform_12, window_bounds = array<i64: 1, 2, 8>}, {pipeline_mode = #tpu.pipeline_mode<synchronous>, transform_indices = @transform_13, window_bounds = array<i64: 2, 8, 32>}, {pipeline_mode = #tpu.pipeline_mode<synchronous>, transform_indices = @transform_14, window_bounds = array<i64: 2, 8, 32>}]} {
    %c0_i32 = arith.constant 0 : i32
    %0 = arith.cmpi eq, %arg0, %c0_i32 : i32
    %1 = arith.extui %0 : i1 to i32
    %c0_i32_0 = arith.constant 0 : i32
    %2 = arith.cmpi ne, %1, %c0_i32_0 : i32
    scf.if %2 {
      %c0_55 = arith.constant 0 : index
      %c0_56 = arith.constant 0 : index
      %c0_57 = arith.constant 0 : index
      %93 = vector.load %arg4[%c0_55, %c0_56, %c0_57] : memref<2x8x32xf32, #tpu.memory_space<vmem>>, vector<2x8x32xf32>
      %c0_58 = arith.constant 0 : index
      %c0_59 = arith.constant 0 : index
      %c0_60 = arith.constant 0 : index
      %94 = vector.load %arg14[%c0_58, %c0_59, %c0_60] : memref<2x8x32xf32, #tpu.memory_space<vmem>>, vector<2x8x32xf32>
      tpu.vector_store %arg14[%c0_58, %c0_59, %c0_60], %93 {strides = array<i32>} : memref<2x8x32xf32, #tpu.memory_space<vmem>>, vector<2x8x32xf32>,
      %c0_61 = arith.constant 0 : index
      %c0_62 = arith.constant 0 : index
      %c0_63 = arith.constant 0 : index
      %95 = vector.load %arg5[%c0_61, %c0_62, %c0_63] : memref<2x8x32xf32, #tpu.memory_space<vmem>>, vector<2x8x32xf32>
      %c0_64 = arith.constant 0 : index
      %c0_65 = arith.constant 0 : index
      %c0_66 = arith.constant 0 : index
      %96 = vector.load %arg15[%c0_64, %c0_65, %c0_66] : memref<2x8x32xf32, #tpu.memory_space<vmem>>, vector<2x8x32xf32>
      tpu.vector_store %arg15[%c0_64, %c0_65, %c0_66], %95 {strides = array<i32>} : memref<2x8x32xf32, #tpu.memory_space<vmem>>, vector<2x8x32xf32>,
    } else {
    }
    %c0 = arith.constant 0 : index
    %c0_1 = arith.constant 0 : index
    %c0_2 = arith.constant 0 : index
    %3 = vector.load %arg1[%c0, %c0_1, %c0_2] : memref<1x2x32xf32, #tpu.memory_space<vmem>>, vector<1x2x32xf32>
    %4 = vector.shape_cast %3 : vector<1x2x32xf32> to vector<2x32xf32>
    %c0_3 = arith.constant 0 : index
    %c0_4 = arith.constant 0 : index
    %c0_5 = arith.constant 0 : index
    %5 = vector.load %arg2[%c0_3, %c0_4, %c0_5] : memref<1x2x8xf32, #tpu.memory_space<vmem>>, vector<1x2x8xf32>
    %6 = vector.shape_cast %5 : vector<1x2x8xf32> to vector<2x8xf32>
    %c0_6 = arith.constant 0 : index
    %c0_7 = arith.constant 0 : index
    %7 = vector.load %arg3[%c0_6, %c0_7] : memref<2x32xf32, #tpu.memory_space<vmem>>, vector<2x32xf32>
    %c0_8 = arith.constant 0 : index
    %c0_9 = arith.constant 0 : index
    %c0_10 = arith.constant 0 : index
    %8 = vector.load %arg14[%c0_8, %c0_9, %c0_10] : memref<2x8x32xf32, #tpu.memory_space<vmem>>, vector<2x8x32xf32>
    %c0_11 = arith.constant 0 : index
    %c0_12 = arith.constant 0 : index
    %c0_13 = arith.constant 0 : index
    %9 = vector.load %arg15[%c0_11, %c0_12, %c0_13] : memref<2x8x32xf32, #tpu.memory_space<vmem>>, vector<2x8x32xf32>
    %c0_14 = arith.constant 0 : index
    %c0_15 = arith.constant 0 : index
    %10 = vector.load %arg6[%c0_14, %c0_15] : memref<32x32xf32, #tpu.memory_space<vmem>>, vector<32x32xf32>
    %cst = arith.constant dense<0.000000e+00> : vector<2x32xf32>
    %11 = tpu.matmul %4, %10, %cst {dimension_numbers = #tpu.dot_dimension_numbers<[1], [0], [0], [1], [0, 0, 1, 1], [], []>} : vector<2x32xf32>, vector<32x32xf32>, vector<2x32xf32> -> vector<2x32xf32>
    %12 = vector.extract_strided_slice %8 {offsets = [0, 0, 0], sizes = [2, 1, 32], strides = [1, 1, 1]} : vector<2x8x32xf32> to vector<2x1x32xf32>
    %13 = vector.shape_cast %12 : vector<2x1x32xf32> to vector<2x32xf32>
    %c0_16 = arith.constant 0 : index
    %c0_17 = arith.constant 0 : index
    %14 = vector.load %arg7[%c0_16, %c0_17] : memref<32x32xf32, #tpu.memory_space<vmem>>, vector<32x32xf32>
    %cst_18 = arith.constant dense<0.000000e+00> : vector<2x32xf32>
    %15 = tpu.matmul %13, %14, %cst_18 {dimension_numbers = #tpu.dot_dimension_numbers<[1], [0], [0], [1], [0, 0, 1, 1], [], []>} : vector<2x32xf32>, vector<32x32xf32>, vector<2x32xf32> -> vector<2x32xf32>
    %16 = arith.addf %11, %15 : vector<2x32xf32>
    %c0_19 = arith.constant 0 : index
    %c0_20 = arith.constant 0 : index
    %17 = vector.load %arg8[%c0_19, %c0_20] : memref<1x32xf32, #tpu.memory_space<vmem>>, vector<1x32xf32>
    %18 = vector.broadcast %17 : vector<1x32xf32> to vector<2x32xf32>
    %19 = arith.addf %16, %18 : vector<2x32xf32>
    %20 = vector.shape_cast %19 : vector<2x32xf32> to vector<2x1x32xf32>
    %21 = vector.broadcast %20 : vector<2x1x32xf32> to vector<2x8x32xf32>
    %22 = arith.mulf %8, %21 : vector<2x8x32xf32>
    %cst_21 = arith.constant dense<0.000000e+00> : vector<2x8xf32>
    %23 = vector.multi_reduction <add>, %22, %cst_21 [2] : vector<2x8x32xf32> to vector<2x8xf32>
    %cst_22 = arith.constant dense<0xFF800000> : vector<2xf32>
    %24 = vector.multi_reduction <maximumf>, %23, %cst_22 [1] : vector<2x8xf32> to vector<2xf32>
    %25 = vector.shape_cast %24 : vector<2xf32> to vector<2x1xf32>
    %26 = vector.broadcast %25 : vector<2x1xf32> to vector<2x8xf32>
    %27 = arith.subf %23, %26 : vector<2x8xf32>
    %28 = math.exp %27 : vector<2x8xf32>
    %29 = arith.mulf %28, %6 : vector<2x8xf32>
    %cst_23 = arith.constant dense<0.000000e+00> : vector<2xf32>
    %30 = vector.multi_reduction <add>, %29, %cst_23 [1] : vector<2x8xf32> to vector<2xf32>
    %31 = vector.shape_cast %30 : vector<2xf32> to vector<2x1xf32>
    %cst_24 = arith.constant 9.99999971E-10 : f32
    %32 = vector.broadcast %cst_24 : f32 to vector<2x1xf32>
    %33 = arith.addf %31, %32 : vector<2x1xf32>
    %34 = tpu.reciprocal %33 {approx = true} : vector<2x1xf32> -> vector<2x1xf32>
    %35 = vector.broadcast %34 : vector<2x1xf32> to vector<2x8xf32>
    %36 = arith.mulf %29, %35 : vector<2x8xf32>
    %37 = vector.shape_cast %36 : vector<2x8xf32> to vector<2x8x1xf32>
    %38 = vector.broadcast %37 : vector<2x8x1xf32> to vector<2x8x32xf32>
    %39 = arith.mulf %8, %38 : vector<2x8x32xf32>
    %cst_25 = arith.constant dense<0.000000e+00> : vector<2x32xf32>
    %40 = vector.multi_reduction <add>, %39, %cst_25 [1] : vector<2x8x32xf32> to vector<2x32xf32>
    %41 = vector.shape_cast %36 : vector<2x8xf32> to vector<2x8x1xf32>
    %42 = vector.broadcast %41 : vector<2x8x1xf32> to vector<2x8x32xf32>
    %43 = arith.mulf %9, %42 : vector<2x8x32xf32>
    %cst_26 = arith.constant dense<0.000000e+00> : vector<2x32xf32>
    %44 = vector.multi_reduction <add>, %43, %cst_26 [1] : vector<2x8x32xf32> to vector<2x32xf32>
    %45 = arith.mulf %40, %7 : vector<2x32xf32>
    %c0_27 = arith.constant 0 : index
    %c0_28 = arith.constant 0 : index
    %46 = vector.load %arg9[%c0_27, %c0_28] : memref<32x128xf32, #tpu.memory_space<vmem>>, vector<32x128xf32>
    %cst_29 = arith.constant dense<0.000000e+00> : vector<2x128xf32>
    %47 = tpu.matmul %4, %46, %cst_29 {dimension_numbers = #tpu.dot_dimension_numbers<[1], [0], [0], [1], [0, 0, 1, 1], [], []>} : vector<2x32xf32>, vector<32x128xf32>, vector<2x128xf32> -> vector<2x128xf32>
    %c0_30 = arith.constant 0 : index
    %c0_31 = arith.constant 0 : index
    %48 = vector.load %arg10[%c0_30, %c0_31] : memref<32x128xf32, #tpu.memory_space<vmem>>, vector<32x128xf32>
    %cst_32 = arith.constant dense<0.000000e+00> : vector<2x128xf32>
    %49 = tpu.matmul %45, %48, %cst_32 {dimension_numbers = #tpu.dot_dimension_numbers<[1], [0], [0], [1], [0, 0, 1, 1], [], []>} : vector<2x32xf32>, vector<32x128xf32>, vector<2x128xf32> -> vector<2x128xf32>
    %50 = arith.addf %47, %49 : vector<2x128xf32>
    %c0_33 = arith.constant 0 : index
    %c0_34 = arith.constant 0 : index
    %51 = vector.load %arg11[%c0_33, %c0_34] : memref<1x128xf32, #tpu.memory_space<vmem>>, vector<1x128xf32>
    %52 = vector.broadcast %51 : vector<1x128xf32> to vector<2x128xf32>
    %53 = arith.addf %50, %52 : vector<2x128xf32>
    %54 = vector.extract_strided_slice %53 {offsets = [0, 0], sizes = [2, 32], strides = [1, 1]} : vector<2x128xf32> to vector<2x32xf32>
    %55 = arith.negf %54 : vector<2x32xf32>
    %56 = math.exp %55 : vector<2x32xf32>
    %cst_35 = arith.constant 1.000000e+00 : f32
    %57 = vector.broadcast %cst_35 : f32 to vector<2x32xf32>
    %58 = arith.addf %57, %56 : vector<2x32xf32>
    %59 = arith.divf %57, %58 : vector<2x32xf32>
    %60 = vector.extract_strided_slice %53 {offsets = [0, 32], sizes = [2, 32], strides = [1, 1]} : vector<2x128xf32> to vector<2x32xf32>
    %61 = arith.negf %60 : vector<2x32xf32>
    %62 = math.exp %61 : vector<2x32xf32>
    %cst_36 = arith.constant 1.000000e+00 : f32
    %63 = vector.broadcast %cst_36 : f32 to vector<2x32xf32>
    %64 = arith.addf %63, %62 : vector<2x32xf32>
    %65 = arith.divf %63, %64 : vector<2x32xf32>
    %66 = vector.extract_strided_slice %53 {offsets = [0, 64], sizes = [2, 32], strides = [1, 1]} : vector<2x128xf32> to vector<2x32xf32>
    %67 = math.tanh %66 : vector<2x32xf32>
    %68 = vector.extract_strided_slice %53 {offsets = [0, 96], sizes = [2, 32], strides = [1, 1]} : vector<2x128xf32> to vector<2x32xf32>
    %69 = arith.negf %68 : vector<2x32xf32>
    %70 = math.exp %69 : vector<2x32xf32>
    %cst_37 = arith.constant 1.000000e+00 : f32
    %71 = vector.broadcast %cst_37 : f32 to vector<2x32xf32>
    %72 = arith.addf %71, %70 : vector<2x32xf32>
    %73 = arith.divf %71, %72 : vector<2x32xf32>
    %74 = arith.mulf %65, %44 : vector<2x32xf32>
    %75 = arith.mulf %59, %67 : vector<2x32xf32>
    %76 = arith.addf %74, %75 : vector<2x32xf32>
    %77 = math.tanh %76 : vector<2x32xf32>
    %78 = arith.mulf %73, %77 : vector<2x32xf32>
    %c0_38 = arith.constant 0 : index
    %c0_39 = arith.constant 0 : index
    %c0_40 = arith.constant 0 : index
    %79 = vector.load %arg12[%c0_38, %c0_39, %c0_40] : memref<1x2x32xf32, #tpu.memory_space<vmem>>, vector<1x2x32xf32>
    %80 = vector.shape_cast %79 : vector<1x2x32xf32> to vector<2x32xf32>
    %81 = vector.shape_cast %78 : vector<2x32xf32> to vector<1x2x32xf32>
    tpu.vector_store %arg12[%c0_38, %c0_39, %c0_40], %81 {strides = array<i32>} : memref<1x2x32xf32, #tpu.memory_space<vmem>>, vector<1x2x32xf32>,
    %c0_41 = arith.constant 0 : index
    %c0_42 = arith.constant 0 : index
    %c0_43 = arith.constant 0 : index
    %82 = vector.load %arg13[%c0_41, %c0_42, %c0_43] : memref<1x2x8xf32, #tpu.memory_space<vmem>>, vector<1x2x8xf32>
    %83 = vector.shape_cast %82 : vector<1x2x8xf32> to vector<2x8xf32>
    %84 = vector.shape_cast %36 : vector<2x8xf32> to vector<1x2x8xf32>
    tpu.vector_store %arg13[%c0_41, %c0_42, %c0_43], %84 {strides = array<i32>} : memref<1x2x8xf32, #tpu.memory_space<vmem>>, vector<1x2x8xf32>,
    %85 = vector.extract_strided_slice %8 {offsets = [0, 0, 0], sizes = [2, 7, 32], strides = [1, 1, 1]} : vector<2x8x32xf32> to vector<2x7x32xf32>
    %c0_44 = arith.constant 0 : index
    %c1 = arith.constant 1 : index
    %c0_45 = arith.constant 0 : index
    %86 = vector.load %arg14[%c0_44, %c1, %c0_45] : memref<2x8x32xf32, #tpu.memory_space<vmem>>, vector<2x7x32xf32>
    tpu.vector_store %arg14[%c0_44, %c1, %c0_45], %85 {strides = array<i32>} : memref<2x8x32xf32, #tpu.memory_space<vmem>>, vector<2x7x32xf32>,
    %87 = vector.extract_strided_slice %9 {offsets = [0, 0, 0], sizes = [2, 7, 32], strides = [1, 1, 1]} : vector<2x8x32xf32> to vector<2x7x32xf32>
    %c0_46 = arith.constant 0 : index
    %c1_47 = arith.constant 1 : index
    %c0_48 = arith.constant 0 : index
    %88 = vector.load %arg15[%c0_46, %c1_47, %c0_48] : memref<2x8x32xf32, #tpu.memory_space<vmem>>, vector<2x7x32xf32>
    tpu.vector_store %arg15[%c0_46, %c1_47, %c0_48], %87 {strides = array<i32>} : memref<2x8x32xf32, #tpu.memory_space<vmem>>, vector<2x7x32xf32>,
    %89 = vector.shape_cast %78 : vector<2x32xf32> to vector<2x1x32xf32>
    %c0_49 = arith.constant 0 : index
    %c0_50 = arith.constant 0 : index
    %c0_51 = arith.constant 0 : index
    %90 = vector.load %arg14[%c0_49, %c0_50, %c0_51] : memref<2x8x32xf32, #tpu.memory_space<vmem>>, vector<2x1x32xf32>
    tpu.vector_store %arg14[%c0_49, %c0_50, %c0_51], %89 {strides = array<i32>} : memref<2x8x32xf32, #tpu.memory_space<vmem>>, vector<2x1x32xf32>,
    %91 = vector.shape_cast %76 : vector<2x32xf32> to vector<2x1x32xf32>
    %c0_52 = arith.constant 0 : index
    %c0_53 = arith.constant 0 : index
    %c0_54 = arith.constant 0 : index
    %92 = vector.load %arg15[%c0_52, %c0_53, %c0_54] : memref<2x8x32xf32, #tpu.memory_space<vmem>>, vector<2x1x32xf32>
    tpu.vector_store %arg15[%c0_52, %c0_53, %c0_54], %91 {strides = array<i32>} : memref<2x8x32xf32, #tpu.memory_space<vmem>>, vector<2x1x32xf32>,
    return
  }
  func.func @transform_0(%arg0: i32) -> (i32, i32, i32) {
    %c0_i32 = arith.constant 0 : i32
    %c0_i32_0 = arith.constant 0 : i32
    %c0_i32_1 = arith.constant 0 : i32
    return %arg0, %c0_i32, %c0_i32_0 : i32, i32, i32
  }
  func.func @transform_1(%arg0: i32) -> (i32, i32, i32) {
    %c0_i32 = arith.constant 0 : i32
    %c0_i32_0 = arith.constant 0 : i32
    %c0_i32_1 = arith.constant 0 : i32
    return %arg0, %c0_i32, %c0_i32_0 : i32, i32, i32
  }
  func.func @transform_2(%arg0: i32) -> (i32, i32) {
    %c0_i32 = arith.constant 0 : i32
    %c0_i32_0 = arith.constant 0 : i32
    %c0_i32_1 = arith.constant 0 : i32
    return %c0_i32, %c0_i32_0 : i32, i32
  }
  func.func @transform_3(%arg0: i32) -> (i32, i32, i32) {
    %c0_i32 = arith.constant 0 : i32
    %c0_i32_0 = arith.constant 0 : i32
    %c0_i32_1 = arith.constant 0 : i32
    %c0_i32_2 = arith.constant 0 : i32
    return %c0_i32, %c0_i32_0, %c0_i32_1 : i32, i32, i32
  }
  func.func @transform_4(%arg0: i32) -> (i32, i32, i32) {
    %c0_i32 = arith.constant 0 : i32
    %c0_i32_0 = arith.constant 0 : i32
    %c0_i32_1 = arith.constant 0 : i32
    %c0_i32_2 = arith.constant 0 : i32
    return %c0_i32, %c0_i32_0, %c0_i32_1 : i32, i32, i32
  }
  func.func @transform_5(%arg0: i32) -> (i32, i32) {
    %c0_i32 = arith.constant 0 : i32
    %c0_i32_0 = arith.constant 0 : i32
    %c0_i32_1 = arith.constant 0 : i32
    return %c0_i32, %c0_i32_0 : i32, i32
  }
  func.func @transform_6(%arg0: i32) -> (i32, i32) {
    %c0_i32 = arith.constant 0 : i32
    %c0_i32_0 = arith.constant 0 : i32
    %c0_i32_1 = arith.constant 0 : i32
    return %c0_i32, %c0_i32_0 : i32, i32
  }
  func.func @transform_7(%arg0: i32) -> (i32, i32) {
    %c0_i32 = arith.constant 0 : i32
    %c0_i32_0 = arith.constant 0 : i32
    %c0_i32_1 = arith.constant 0 : i32
    return %c0_i32, %c0_i32_0 : i32, i32
  }
  func.func @transform_8(%arg0: i32) -> (i32, i32) {
    %c0_i32 = arith.constant 0 : i32
    %c0_i32_0 = arith.constant 0 : i32
    %c0_i32_1 = arith.constant 0 : i32
    return %c0_i32, %c0_i32_0 : i32, i32
  }
  func.func @transform_9(%arg0: i32) -> (i32, i32) {
    %c0_i32 = arith.constant 0 : i32
    %c0_i32_0 = arith.constant 0 : i32
    %c0_i32_1 = arith.constant 0 : i32
    return %c0_i32, %c0_i32_0 : i32, i32
  }
  func.func @transform_10(%arg0: i32) -> (i32, i32) {
    %c0_i32 = arith.constant 0 : i32
    %c0_i32_0 = arith.constant 0 : i32
    %c0_i32_1 = arith.constant 0 : i32
    return %c0_i32, %c0_i32_0 : i32, i32
  }
  func.func @transform_11(%arg0: i32) -> (i32, i32, i32) {
    %c0_i32 = arith.constant 0 : i32
    %c0_i32_0 = arith.constant 0 : i32
    %c0_i32_1 = arith.constant 0 : i32
    return %arg0, %c0_i32, %c0_i32_0 : i32, i32, i32
  }
  func.func @transform_12(%arg0: i32) -> (i32, i32, i32) {
    %c0_i32 = arith.constant 0 : i32
    %c0_i32_0 = arith.constant 0 : i32
    %c0_i32_1 = arith.constant 0 : i32
    return %arg0, %c0_i32, %c0_i32_0 : i32, i32, i32
  }
  func.func @transform_13(%arg0: i32) -> (i32, i32, i32) {
    %c0_i32 = arith.constant 0 : i32
    %c0_i32_0 = arith.constant 0 : i32
    %c0_i32_1 = arith.constant 0 : i32
    %c0_i32_2 = arith.constant 0 : i32
    return %c0_i32, %c0_i32_0, %c0_i32_1 : i32, i32, i32
  }
  func.func @transform_14(%arg0: i32) -> (i32, i32, i32) {
    %c0_i32 = arith.constant 0 : i32
    %c0_i32_0 = arith.constant 0 : i32
    %c0_i32_1 = arith.constant 0 : i32
    %c0_i32_2 = arith.constant 0 : i32
    return %c0_i32, %c0_i32_0, %c0_i32_1 : i32, i32, i32
  }
}

</mosaic_0001>

<llo_original>
// kernel: reading_network_sequence.1
$region0: #{reading_network_sequence.1}
  #allocation0 [shape = 'u32[]', space=smem, size = 0x4, offset = 0x4, fixed_abs, tag = 'smem constant byte address 0x4 - core index']
  #allocation1 [shape = 'u32[144,128]{1,0:T(1,128)}', space=vmem, size = 0x12000, scoped, tag = 'internal scratch']
  %s0 = inlined_call_operand.vmem [shape: f32[8,2,32], index: 0, kind: input, shape index: {}]
  %s1 = inlined_call_operand.vmem [shape: f32[8,2,8], index: 1, kind: input, shape index: {}]
  %s2 = inlined_call_operand.vmem [shape: f32[2,32], index: 2, kind: input, shape index: {}]
  %s3 = inlined_call_operand.hbm [shape: f32[2,8,32], index: 3, kind: input, shape index: {}, may-alias: {3,13}]
  %s4 = inlined_call_operand.hbm [shape: f32[2,8,32], index: 4, kind: input, shape index: {}, may-alias: {4,14}]
  %s5 = inlined_call_operand.vmem [shape: f32[32,32], index: 5, kind: input, shape index: {}]
  %s6 = inlined_call_operand.vmem [shape: f32[32,32], index: 6, kind: input, shape index: {}]
  %s7 = inlined_call_operand.vmem [shape: f32[1,32], index: 7, kind: input, shape index: {}]
  %s8 = inlined_call_operand.vmem [shape: f32[32,128], index: 8, kind: input, shape index: {}]
  %s9 = inlined_call_operand.vmem [shape: f32[32,128], index: 9, kind: input, shape index: {}]
  %s10 = inlined_call_operand.vmem [shape: f32[1,128], index: 10, kind: input, shape index: {}]
  %s11 = inlined_call_operand.hbm [shape: f32[8,2,32], index: 11, kind: output, shape index: {0}]
  %s12 = inlined_call_operand.hbm [shape: f32[8,2,8], index: 12, kind: output, shape index: {1}]
  %s13 = inlined_call_operand.hbm [shape: f32[2,8,32], index: 13, kind: output, shape index: {2}, may-alias: {3,13}]
  %s14 = inlined_call_operand.hbm [shape: f32[2,8,32], index: 14, kind: output, shape index: {3}, may-alias: {4,14}]
  %15 = xla_tuple %s11, %s12, %s13, %s14
  %s16 = sld [smem:[#allocation0]]
  $region113: #{reading_network_sequence.1} parent=0
    _
  %s18 = ssub.s32 1, %s16
  %s19 = scalar_select 0, %s18, %s16
  $region1: #{reading_network_sequence.1} parent=0
    #allocation2 [shape = 'u8[8192]{0}', space=vmem, size = 0x2000, scoped, tag = 'input window, operand 3, single buffered']
    #allocation3 [shape = 's32[2]{0}', space=sflag, size = 0x8, scoped, tag = 'scoped memory for reading_network_sequence.1']
    #allocation4 [shape = 's32[2]{0}', space=sflag, size = 0x8, scoped, tag = 'scoped memory for reading_network_sequence.1']
    #allocation5 [shape = 'u8[8192]{0}', space=vmem, size = 0x2000, scoped, tag = 'input window, operand 4, single buffered']
    #allocation6 [shape = 's32[1]{0}', space=sflag, size = 0x4, scoped, tag = 'scoped memory for reading_network_sequence.1']
    #allocation7 [shape = 'u8[2048]{0}', space=vmem, size = 0x800, scoped, tag = 'output window, operand 0']
    #allocation8 [shape = 'u8[2048]{0}', space=vmem, size = 0x800, scoped, tag = 'output window, operand 1']
    #allocation9 [shape = 's32[2]{0}', space=sflag, size = 0x8, scoped, tag = 'scoped memory for reading_network_sequence.1']
    #allocation10 [shape = 'u8[8192]{0}', space=vmem, size = 0x2000, scoped, tag = 'output window, operand 2, single buffered']
    #allocation11 [shape = 'u8[8192]{0}', space=vmem, size = 0x2000, scoped, tag = 'output window, operand 3, single buffered']
    #allocation12 [shape = 's32[1]{0}', space=sflag, size = 0x4, scoped, tag = 'scoped memory for reading_network_sequence.1']
    %20 = vsyncpa [#allocation3], 0
    %21 = vsyncpa [#allocation6], 0
    %22 = vsyncpa [#allocation4], 0
    %s23 = scalar_lea.sflag [#allocation4], 1
    %24 = vsyncpa %s23, 0
    %25 = vsyncpa [#allocation9], 0
    %s26 = scalar_lea.sflag [#allocation9], 1
    %27 = vsyncpa %s26, 0
    %28 = vsyncpa [#allocation12], 0
    loop: start=0, step=1, limit=10
    $region2: #{reading_network_sequence.1} parent=1 // loop_pre_header
      _
    $region3: #{reading_network_sequence.1} parent=1 // loop_header
      %s30 = sphi 0, %s34
      %p31 = scmp.ge.s32.totalorder %s30, 10
      %s40 = sphi 0, %s42
      %s43 = sphi 0, %s40
      %s44 = sphi 0, %s43
      %s60 = sphi 0, %s44
      %s66 = sphi 0, %s68
      %s69 = sphi 0, %s66
      %s70 = sphi 0, %s69
      %s86 = sphi 0, %s70
      %s90 = sphi 0, %s90
      %s92 = sphi 0, %s90
      %s93 = sphi 0, %s92
      %s107 = sphi 0, %s93
      %s111 = sphi 0, %s111
      %s113 = sphi 0, %s111
      %s114 = sphi 0, %s113
      %s128 = sphi 0, %s114
      %s132 = sphi 0, %s132
      %s134 = sphi 0, %s132
      %s135 = sphi 0, %s134
      %s149 = sphi 0, %s135
      %s153 = sphi 0, %s153
      %s155 = sphi 0, %s153
      %s156 = sphi 0, %s155
      %s170 = sphi 0, %s156
      %s174 = sphi 0, %s174
      %s176 = sphi 0, %s174
      %s177 = sphi 0, %s176
      %s191 = sphi 0, %s177
      %s195 = sphi 0, %s195
      %s197 = sphi 0, %s195
      %s198 = sphi 0, %s197
      %s212 = sphi 0, %s198
      %s216 = sphi 0, %s216
      %s218 = sphi 0, %s216
      %s219 = sphi 0, %s218
      %s233 = sphi 0, %s219
      %s237 = sphi 0, %s237
      %s239 = sphi 0, %s237
      %s240 = sphi 0, %s239
      %s254 = sphi 0, %s240
      %s258 = sphi 0, %s258
      %s260 = sphi 0, %s258
      %s261 = sphi 0, %s260
      %s275 = sphi 0, %s261
      %s281 = sphi 0, %s283
      %s284 = sphi 0, %s281
      %s285 = sphi 0, %s284
      %s301 = sphi 0, %s285
      %s307 = sphi 0, %s309
      %s310 = sphi 0, %s307
      %s311 = sphi 0, %s310
      %s327 = sphi 0, %s311
      %s331 = sphi 0, %s331
      %s333 = sphi 0, %s331
      %s334 = sphi 0, %s333
      %s348 = sphi 0, %s334
      %s352 = sphi 0, %s352
      %s354 = sphi 0, %s352
      %s355 = sphi 0, %s354
      %s369 = sphi 0, %s355
    $region4: #{reading_network_sequence.1} parent=1 // loop_header_branch
      %33 = sbr.rel (%p31) target = $region8
    $region5: #{reading_network_sequence.1} parent=1 // loop_body
      %s35 = ssub.s32 %s30, 1
      %s36 = ssub.s32 %s30, 2
      %s37 = sadd.s32 %s30, 1
      %s38 = ssub.s32 %s30, %s37
      %p39 = scmp.eq.s32.totalorder %s38, 0
      %s41 = sadd.s32 %s40, 1
      %s42 = scalar_select %p39, %s40, %s41
      %p45 = pneg %p39
      %p46 = scmp.eq.s32.totalorder %s30, 7
      %p47 = por %p45, %p46
      %p48 = scmp.ne.s32.totalorder %s40, %s43
      %p49 = scmp.eq.s32.totalorder %s30, 0
      %p50 = por %p48, %p49
      %p51 = scmp.ne.s32.totalorder %s40, %s43
      %p52 = scmp.eq.s32.totalorder %s35, 7
      %p53 = por %p51, %p52
      %p54 = scmp.ne.s32.totalorder %s43, %s44
      %p55 = scmp.eq.s32.totalorder %s35, 0
      %p56 = por %p54, %p55
      %p57 = scmp.ne.s32.totalorder %s43, %s44
      %p58 = scmp.eq.s32.totalorder %s36, 7
      %p59 = por %p57, %p58
      %p61 = scmp.ne.s32.totalorder %s44, %s60
      %p62 = scmp.eq.s32.totalorder %s36, 0
      %p63 = por %p61, %p62
      %s64 = ssub.s32 %s30, %s37
      %p65 = scmp.eq.s32.totalorder %s64, 0
      %s67 = sadd.s32 %s66, 1
      %s68 = scalar_select %p65, %s66, %s67
      %p71 = pneg %p65
      %p72 = scmp.eq.s32.totalorder %s30, 7
      %p73 = por %p71, %p72
      %p74 = scmp.ne.s32.totalorder %s66, %s69
      %p75 = scmp.eq.s32.totalorder %s30, 0
      %p76 = por %p74, %p75
      %p77 = scmp.ne.s32.totalorder %s66, %s69
      %p78 = scmp.eq.s32.totalorder %s35, 7
      %p79 = por %p77, %p78
      %p80 = scmp.ne.s32.totalorder %s69, %s70
      %p81 = scmp.eq.s32.totalorder %s35, 0
      %p82 = por %p80, %p81
      %p83 = scmp.ne.s32.totalorder %s69, %s70
      %p84 = scmp.eq.s32.totalorder %s36, 7
      %p85 = por %p83, %p84
      %p87 = scmp.ne.s32.totalorder %s70, %s86
      %p88 = scmp.eq.s32.totalorder %s36, 0
      %p89 = por %p87, %p88
      %s91 = sadd.s32 %s90, 1
      %p94 = scmp.eq.s32.totalorder %s30, 7
      %p95 = scmp.ne.s32.totalorder %s90, %s92
      %p96 = scmp.eq.s32.totalorder %s30, 0
      %p97 = por %p95, %p96
      %p98 = scmp.ne.s32.totalorder %s90, %s92
      %p99 = scmp.eq.s32.totalorder %s35, 7
      %p100 = por %p98, %p99
      %p101 = scmp.ne.s32.totalorder %s92, %s93
      %p102 = scmp.eq.s32.totalorder %s35, 0
      %p103 = por %p101, %p102
      %p104 = scmp.ne.s32.totalorder %s92, %s93
      %p105 = scmp.eq.s32.totalorder %s36, 7
      %p106 = por %p104, %p105
      %p108 = scmp.ne.s32.totalorder %s93, %s107
      %p109 = scmp.eq.s32.totalorder %s36, 0
      %p110 = por %p108, %p109
      %s112 = sadd.s32 %s111, 1
      %p115 = scmp.eq.s32.totalorder %s30, 7
      %p116 = scmp.ne.s32.totalorder %s111, %s113
      %p117 = scmp.eq.s32.totalorder %s30, 0
      %p118 = por %p116, %p117
      %p119 = scmp.ne.s32.totalorder %s111, %s113
      %p120 = scmp.eq.s32.totalorder %s35, 7
      %p121 = por %p119, %p120
      %p122 = scmp.ne.s32.totalorder %s113, %s114
      %p123 = scmp.eq.s32.totalorder %s35, 0
      %p124 = por %p122, %p123
      %p125 = scmp.ne.s32.totalorder %s113, %s114
      %p126 = scmp.eq.s32.totalorder %s36, 7
      %p127 = por %p125, %p126
      %p129 = scmp.ne.s32.totalorder %s114, %s128
      %p130 = scmp.eq.s32.totalorder %s36, 0
      %p131 = por %p129, %p130
      %s133 = sadd.s32 %s132, 1
      %p136 = scmp.eq.s32.totalorder %s30, 7
      %p137 = scmp.ne.s32.totalorder %s132, %s134
      %p138 = scmp.eq.s32.totalorder %s30, 0
      %p139 = por %p137, %p138
      %p140 = scmp.ne.s32.totalorder %s132, %s134
      %p141 = scmp.eq.s32.totalorder %s35, 7
      %p142 = por %p140, %p141
      %p143 = scmp.ne.s32.totalorder %s134, %s135
      %p144 = scmp.eq.s32.totalorder %s35, 0
      %p145 = por %p143, %p144
      %p146 = scmp.ne.s32.totalorder %s134, %s135
      %p147 = scmp.eq.s32.totalorder %s36, 7
      %p148 = por %p146, %p147
      %p150 = scmp.ne.s32.totalorder %s135, %s149
      %p151 = scmp.eq.s32.totalorder %s36, 0
      %p152 = por %p150, %p151
      %s154 = sadd.s32 %s153, 1
      %p157 = scmp.eq.s32.totalorder %s30, 7
      %p158 = scmp.ne.s32.totalorder %s153, %s155
      %p159 = scmp.eq.s32.totalorder %s30, 0
      %p160 = por %p158, %p159
      %p161 = scmp.ne.s32.totalorder %s153, %s155
      %p162 = scmp.eq.s32.totalorder %s35, 7
      %p163 = por %p161, %p162
      %p164 = scmp.ne.s32.totalorder %s155, %s156
      %p165 = scmp.eq.s32.totalorder %s35, 0
      %p166 = por %p164, %p165
      %p167 = scmp.ne.s32.totalorder %s155, %s156
      %p168 = scmp.eq.s32.totalorder %s36, 7
      %p169 = por %p167, %p168
      %p171 = scmp.ne.s32.totalorder %s156, %s170
      %p172 = scmp.eq.s32.totalorder %s36, 0
      %p173 = por %p171, %p172
      %s175 = sadd.s32 %s174, 1
      %p178 = scmp.eq.s32.totalorder %s30, 7
      %p179 = scmp.ne.s32.totalorder %s174, %s176
      %p180 = scmp.eq.s32.totalorder %s30, 0
      %p181 = por %p179, %p180
      %p182 = scmp.ne.s32.totalorder %s174, %s176
      %p183 = scmp.eq.s32.totalorder %s35, 7
      %p184 = por %p182, %p183
      %p185 = scmp.ne.s32.totalorder %s176, %s177
      %p186 = scmp.eq.s32.totalorder %s35, 0
      %p187 = por %p185, %p186
      %p188 = scmp.ne.s32.totalorder %s176, %s177
      %p189 = scmp.eq.s32.totalorder %s36, 7
      %p190 = por %p188, %p189
      %p192 = scmp.ne.s32.totalorder %s177, %s191
      %p193 = scmp.eq.s32.totalorder %s36, 0
      %p194 = por %p192, %p193
      %s196 = sadd.s32 %s195, 1
      %p199 = scmp.eq.s32.totalorder %s30, 7
      %p200 = scmp.ne.s32.totalorder %s195, %s197
      %p201 = scmp.eq.s32.totalorder %s30, 0
      %p202 = por %p200, %p201
      %p203 = scmp.ne.s32.totalorder %s195, %s197
      %p204 = scmp.eq.s32.totalorder %s35, 7
      %p205 = por %p203, %p204
      %p206 = scmp.ne.s32.totalorder %s197, %s198
      %p207 = scmp.eq.s32.totalorder %s35, 0
      %p208 = por %p206, %p207
      %p209 = scmp.ne.s32.totalorder %s197, %s198
      %p210 = scmp.eq.s32.totalorder %s36, 7
      %p211 = por %p209, %p210
      %p213 = scmp.ne.s32.totalorder %s198, %s212
      %p214 = scmp.eq.s32.totalorder %s36, 0
      %p215 = por %p213, %p214
      %s217 = sadd.s32 %s216, 1
      %p220 = scmp.eq.s32.totalorder %s30, 7
      %p221 = scmp.ne.s32.totalorder %s216, %s218
      %p222 = scmp.eq.s32.totalorder %s30, 0
      %p223 = por %p221, %p222
      %p224 = scmp.ne.s32.totalorder %s216, %s218
      %p225 = scmp.eq.s32.totalorder %s35, 7
      %p226 = por %p224, %p225
      %p227 = scmp.ne.s32.totalorder %s218, %s219
      %p228 = scmp.eq.s32.totalorder %s35, 0
      %p229 = por %p227, %p228
      %p230 = scmp.ne.s32.totalorder %s218, %s219
      %p231 = scmp.eq.s32.totalorder %s36, 7
      %p232 = por %p230, %p231
      %p234 = scmp.ne.s32.totalorder %s219, %s233
      %p235 = scmp.eq.s32.totalorder %s36, 0
      %p236 = por %p234, %p235
      %s238 = sadd.s32 %s237, 1
      %p241 = scmp.eq.s32.totalorder %s30, 7
      %p242 = scmp.ne.s32.totalorder %s237, %s239
      %p243 = scmp.eq.s32.totalorder %s30, 0
      %p244 = por %p242, %p243
      %p245 = scmp.ne.s32.totalorder %s237, %s239
      %p246 = scmp.eq.s32.totalorder %s35, 7
      %p247 = por %p245, %p246
      %p248 = scmp.ne.s32.totalorder %s239, %s240
      %p249 = scmp.eq.s32.totalorder %s35, 0
      %p250 = por %p248, %p249
      %p251 = scmp.ne.s32.totalorder %s239, %s240
      %p252 = scmp.eq.s32.totalorder %s36, 7
      %p253 = por %p251, %p252
      %p255 = scmp.ne.s32.totalorder %s240, %s254
      %p256 = scmp.eq.s32.totalorder %s36, 0
      %p257 = por %p255, %p256
      %s259 = sadd.s32 %s258, 1
      %p262 = scmp.eq.s32.totalorder %s30, 7
      %p263 = scmp.ne.s32.totalorder %s258, %s260
      %p264 = scmp.eq.s32.totalorder %s30, 0
      %p265 = por %p263, %p264
      %p266 = scmp.ne.s32.totalorder %s258, %s260
      %p267 = scmp.eq.s32.totalorder %s35, 7
      %p268 = por %p266, %p267
      %p269 = scmp.ne.s32.totalorder %s260, %s261
      %p270 = scmp.eq.s32.totalorder %s35, 0
      %p271 = por %p269, %p270
      %p272 = scmp.ne.s32.totalorder %s260, %s261
      %p273 = scmp.eq.s32.totalorder %s36, 7
      %p274 = por %p272, %p273
      %p276 = scmp.ne.s32.totalorder %s261, %s275
      %p277 = scmp.eq.s32.totalorder %s36, 0
      %p278 = por %p276, %p277
      %s279 = ssub.s32 %s30, %s37
      %p280 = scmp.eq.s32.totalorder %s279, 0
      %s282 = sadd.s32 %s281, 1
      %s283 = scalar_select %p280, %s281, %s282
      %p286 = pneg %p280
      %p287 = scmp.eq.s32.totalorder %s30, 7
      %p288 = por %p286, %p287
      %p289 = scmp.ne.s32.totalorder %s281, %s284
      %p290 = scmp.eq.s32.totalorder %s30, 0
      %p291 = por %p289, %p290
      %p292 = scmp.ne.s32.totalorder %s281, %s284
      %p293 = scmp.eq.s32.totalorder %s35, 7
      %p294 = por %p292, %p293
      %p295 = scmp.ne.s32.totalorder %s284, %s285
      %p296 = scmp.eq.s32.totalorder %s35, 0
      %p297 = por %p295, %p296
      %p298 = scmp.ne.s32.totalorder %s284, %s285
      %p299 = scmp.eq.s32.totalorder %s36, 7
      %p300 = por %p298, %p299
      %p302 = scmp.ne.s32.totalorder %s285, %s301
      %p303 = scmp.eq.s32.totalorder %s36, 0
      %p304 = por %p302, %p303
      %s305 = ssub.s32 %s30, %s37
      %p306 = scmp.eq.s32.totalorder %s305, 0
      %s308 = sadd.s32 %s307, 1
      %s309 = scalar_select %p306, %s307, %s308
      %p312 = pneg %p306
      %p313 = scmp.eq.s32.totalorder %s30, 7
      %p314 = por %p312, %p313
      %p315 = scmp.ne.s32.totalorder %s307, %s310
      %p316 = scmp.eq.s32.totalorder %s30, 0
      %p317 = por %p315, %p316
      %p318 = scmp.ne.s32.totalorder %s307, %s310
      %p319 = scmp.eq.s32.totalorder %s35, 7
      %p320 = por %p318, %p319
      %p321 = scmp.ne.s32.totalorder %s310, %s311
      %p322 = scmp.eq.s32.totalorder %s35, 0
      %p323 = por %p321, %p322
      %p324 = scmp.ne.s32.totalorder %s310, %s311
      %p325 = scmp.eq.s32.totalorder %s36, 7
      %p326 = por %p324, %p325
      %p328 = scmp.ne.s32.totalorder %s311, %s327
      %p329 = scmp.eq.s32.totalorder %s36, 0
      %p330 = por %p328, %p329
      %s332 = sadd.s32 %s331, 1
      %p335 = scmp.eq.s32.totalorder %s30, 7
      %p336 = scmp.ne.s32.totalorder %s331, %s333
      %p337 = scmp.eq.s32.totalorder %s30, 0
      %p338 = por %p336, %p337
      %p339 = scmp.ne.s32.totalorder %s331, %s333
      %p340 = scmp.eq.s32.totalorder %s35, 7
      %p341 = por %p339, %p340
      %p342 = scmp.ne.s32.totalorder %s333, %s334
      %p343 = scmp.eq.s32.totalorder %s35, 0
      %p344 = por %p342, %p343
      %p345 = scmp.ne.s32.totalorder %s333, %s334
      %p346 = scmp.eq.s32.totalorder %s36, 7
      %p347 = por %p345, %p346
      %p349 = scmp.ne.s32.totalorder %s334, %s348
      %p350 = scmp.eq.s32.totalorder %s36, 0
      %p351 = por %p349, %p350
      %s353 = sadd.s32 %s352, 1
      %p356 = scmp.eq.s32.totalorder %s30, 7
      %p357 = scmp.ne.s32.totalorder %s352, %s354
      %p358 = scmp.eq.s32.totalorder %s30, 0
      %p359 = por %p357, %p358
      %p360 = scmp.ne.s32.totalorder %s352, %s354
      %p361 = scmp.eq.s32.totalorder %s35, 7
      %p362 = por %p360, %p361
      %p363 = scmp.ne.s32.totalorder %s354, %s355
      %p364 = scmp.eq.s32.totalorder %s35, 0
      %p365 = por %p363, %p364
      %p366 = scmp.ne.s32.totalorder %s354, %s355
      %p367 = scmp.eq.s32.totalorder %s36, 7
      %p368 = por %p366, %p367
      %p370 = scmp.ne.s32.totalorder %s355, %s369
      %p371 = scmp.eq.s32.totalorder %s36, 0
      %p372 = por %p370, %p371
      %p373 = scmp.le.s32.totalorder 1, %s30
      %p374 = scmp.lt.s32.totalorder %s30, 9
      %p375 = pnand %p373, %p374
      %p376 = pneg %p375
      // Predicated region
      $region9: #{reading_network_sequence.1} parent=5 // pred_check
        _
      $region10: #{reading_network_sequence.1} parent=5 // pred_check_branch
        %378 = sbr.rel (%p375) target = $region12
      $region11: #{reading_network_sequence.1} parent=5 // pred_region
        %s379 = ssub.s32 %s30, 1
        // Predicated region
        $region13: #{reading_network_sequence.1} parent=11 // pred_check
          %p380 = pneg %p103
        $region14: #{reading_network_sequence.1} parent=11 // pred_check_branch
          %382 = sbr.rel (%p380) target = $region16
        $region15: #{reading_network_sequence.1} parent=11 // pred_region
          _
        $region16: #{reading_network_sequence.1} parent=11 // pred_fallthru
          _
        // Predicated region
        $region17: #{reading_network_sequence.1} parent=11 // pred_check
          %p383 = pneg %p124
        $region18: #{reading_network_sequence.1} parent=11 // pred_check_branch
          %385 = sbr.rel (%p383) target = $region20
        $region19: #{reading_network_sequence.1} parent=11 // pred_region
          %s387 = ssub.s32 256, 256
          %388 = vsyncadd [#allocation3], %s387
          %s389 = sshll.u32 [#allocation2], 4
          %s390 = int_to_ptr.vmem [resolvable:$true] %s389
          %395 = dma.hbm_to_vmem [thread:$0]  %s3, 256, %s390, [#allocation3], 128, 128, 8
        $region20: #{reading_network_sequence.1} parent=11 // pred_fallthru
          _
        // Predicated region
        $region21: #{reading_network_sequence.1} parent=11 // pred_check
          %p396 = pneg %p145
        $region22: #{reading_network_sequence.1} parent=11 // pred_check_branch
          %398 = sbr.rel (%p396) target = $region24
        $region23: #{reading_network_sequence.1} parent=11 // pred_region
          %s400 = ssub.s32 256, 256
          %401 = vsyncadd [#allocation6], %s400
          %s402 = sshll.u32 [#allocation5], 4
          %s403 = int_to_ptr.vmem [resolvable:$true] %s402
          %408 = dma.hbm_to_vmem [thread:$0]  %s4, 256, %s403, [#allocation6], 128, 128, 8
        $region24: #{reading_network_sequence.1} parent=11 // pred_fallthru
          _
        // Predicated region
        $region25: #{reading_network_sequence.1} parent=11 // pred_check
          %p409 = pneg %p166
        $region26: #{reading_network_sequence.1} parent=11 // pred_check_branch
          %411 = sbr.rel (%p409) target = $region28
        $region27: #{reading_network_sequence.1} parent=11 // pred_region
          _
        $region28: #{reading_network_sequence.1} parent=11 // pred_fallthru
          _
        // Predicated region
        $region29: #{reading_network_sequence.1} parent=11 // pred_check
          %p412 = pneg %p187
        $region30: #{reading_network_sequence.1} parent=11 // pred_check_branch
          %414 = sbr.rel (%p412) target = $region32
        $region31: #{reading_network_sequence.1} parent=11 // pred_region
          _
        $region32: #{reading_network_sequence.1} parent=11 // pred_fallthru
          _
        // Predicated region
        $region33: #{reading_network_sequence.1} parent=11 // pred_check
          %p415 = pneg %p208
        $region34: #{reading_network_sequence.1} parent=11 // pred_check_branch
          %417 = sbr.rel (%p415) target = $region36
        $region35: #{reading_network_sequence.1} parent=11 // pred_region
          _
        $region36: #{reading_network_sequence.1} parent=11 // pred_fallthru
          _
        // Predicated region
        $region37: #{reading_network_sequence.1} parent=11 // pred_check
          %p418 = pneg %p229
        $region38: #{reading_network_sequence.1} parent=11 // pred_check_branch
          %420 = sbr.rel (%p418) target = $region40
        $region39: #{reading_network_sequence.1} parent=11 // pred_region
          _
        $region40: #{reading_network_sequence.1} parent=11 // pred_fallthru
          _
        // Predicated region
        $region41: #{reading_network_sequence.1} parent=11 // pred_check
          %p421 = pneg %p250
        $region42: #{reading_network_sequence.1} parent=11 // pred_check_branch
          %423 = sbr.rel (%p421) target = $region44
        $region43: #{reading_network_sequence.1} parent=11 // pred_region
          _
        $region44: #{reading_network_sequence.1} parent=11 // pred_fallthru
          _
        // Predicated region
        $region45: #{reading_network_sequence.1} parent=11 // pred_check
          %p424 = pneg %p271
        $region46: #{reading_network_sequence.1} parent=11 // pred_check_branch
          %426 = sbr.rel (%p424) target = $region48
        $region47: #{reading_network_sequence.1} parent=11 // pred_region
          _
        $region48: #{reading_network_sequence.1} parent=11 // pred_fallthru
          _
      $region12: #{reading_network_sequence.1} parent=5 // pred_fallthru
        _
      %p427 = scmp.lt.s32.totalorder %s30, 8
      // Predicated region
      $region49: #{reading_network_sequence.1} parent=5 // pred_check
        %p428 = pneg %p427
      $region50: #{reading_network_sequence.1} parent=5 // pred_check_branch
        %430 = sbr.rel (%p428) target = $region52
      $region51: #{reading_network_sequence.1} parent=5 // pred_region
        // Predicated region
        $region53: #{reading_network_sequence.1} parent=51 // pred_check
          %p431 = pneg %p50
        $region54: #{reading_network_sequence.1} parent=51 // pred_check_branch
          %433 = sbr.rel (%p431) target = $region56
        $region55: #{reading_network_sequence.1} parent=51 // pred_region
          %p434 = scmp.lt.s32.totalorder %s30, 7
          %s435 = scalar_select %p434, %s30, 7
          %s436 = smul.addr %s435, 2
          %s437 = scalar_lea.vmem %s0, %s436
        $region56: #{reading_network_sequence.1} parent=51 // pred_fallthru
          _
        // Predicated region
        $region57: #{reading_network_sequence.1} parent=51 // pred_check
          %p438 = pneg %p76
        $region58: #{reading_network_sequence.1} parent=51 // pred_check_branch
          %440 = sbr.rel (%p438) target = $region60
        $region59: #{reading_network_sequence.1} parent=51 // pred_region
          %p441 = scmp.lt.s32.totalorder %s30, 7
          %s442 = scalar_select %p441, %s30, 7
          %s443 = smul.addr %s442, 2
          %s444 = scalar_lea.vmem %s1, %s443
        $region60: #{reading_network_sequence.1} parent=51 // pred_fallthru
          _
      $region52: #{reading_network_sequence.1} parent=5 // pred_fallthru
        _
      %p445 = scmp.le.s32.totalorder 1, %s30
      %p446 = scmp.lt.s32.totalorder %s30, 9
      %p447 = pnand %p445, %p446
      %p448 = pneg %p447
      // Predicated region
      $region61: #{reading_network_sequence.1} parent=5 // pred_check
        _
      $region62: #{reading_network_sequence.1} parent=5 // pred_check_branch
        %450 = sbr.rel (%p447) target = $region64
      $region63: #{reading_network_sequence.1} parent=5 // pred_region
        %s451 = ssub.s32 %s30, 1
        // Predicated region
        $region65: #{reading_network_sequence.1} parent=63 // pred_check
          %p452 = pneg %p124
        $region66: #{reading_network_sequence.1} parent=63 // pred_check_branch
          %454 = sbr.rel (%p452) target = $region68
        $region67: #{reading_network_sequence.1} parent=63 // pred_region
          %455 = dma.done [#allocation3], 256
        $region68: #{reading_network_sequence.1} parent=63 // pred_fallthru
          _
        // Predicated region
        $region69: #{reading_network_sequence.1} parent=63 // pred_check
          %p456 = pneg %p145
        $region70: #{reading_network_sequence.1} parent=63 // pred_check_branch
          %458 = sbr.rel (%p456) target = $region72
        $region71: #{reading_network_sequence.1} parent=63 // pred_region
          %459 = dma.done [#allocation6], 256
        $region72: #{reading_network_sequence.1} parent=63 // pred_fallthru
          _
        %p460 = scmp.lt.s32.totalorder %s35, 7
        %s461 = scalar_select %p460, %s35, 7
        %s462 = smul.addr %s461, 2
        %s463 = scalar_lea.vmem %s0, %s462
        %p464 = pneg %p56
        %p465 = pneg %p53
        %p466 = scmp.lt.s32.totalorder %s35, 7
        %s467 = scalar_select %p466, %s35, 7
        %s468 = smul.addr %s467, 2
        %s469 = scalar_lea.vmem %s1, %s468
        %p470 = pneg %p82
        %p471 = pneg %p79
        %p472 = pneg %p103
        %p473 = pneg %p100
        %p474 = pneg %p124
        %p475 = pneg %p121
        %p476 = pneg %p145
        %p477 = pneg %p142
        %p478 = pneg %p166
        %p479 = pneg %p163
        %p480 = pneg %p187
        %p481 = pneg %p184
        %p482 = pneg %p208
        %p483 = pneg %p205
        %p484 = pneg %p229
        %p485 = pneg %p226
        %p486 = pneg %p250
        %p487 = pneg %p247
        %p488 = pneg %p271
        %p489 = pneg %p268
        %p490 = pneg %p297
        %p491 = pneg %p294
        %s492 = sand.u32 %s284, 1
        %s493 = scalar_lea.sflag [#allocation4], %s492
        %s494 = sand.u32 %s284, 1
        %s495 = smul.addr %s494, 2
        %s496 = scalar_lea.vmem [#allocation7], %s495
        %p497 = pneg %p323
        %p498 = pneg %p320
        %s499 = sand.u32 %s35, 1
        %s500 = scalar_lea.sflag [#allocation9], %s499
        %s501 = sand.u32 %s310, 1
        %s502 = smul.addr %s501, 2
        %s503 = scalar_lea.vmem [#allocation8], %s502
        %p504 = pneg %p344
        %p505 = pneg %p341
        %p506 = pneg %p365
        %p507 = pneg %p362
        %p508 = scmp.lt.s32.totalorder %s35, 7
        %s509 = scalar_select %p508, %s35, 7
        %s510 = smul.addr %s509, 2
        %s511 = scalar_lea.vmem %s0, %s510
        %p512 = scmp.lt.s32.totalorder %s35, 7
        %s513 = scalar_select %p512, %s35, 7
        %s514 = smul.addr %s513, 2
        %s515 = scalar_lea.vmem %s1, %s514
        %p516 = scmp.eq.s32.totalorder %s35, 0
        // Predicated region
        $region73: #{reading_network_sequence.1} parent=63 // pred_check
          %p517 = pneg %p516
        $region74: #{reading_network_sequence.1} parent=63 // pred_check_branch
          %519 = sbr.rel (%p517) target = $region76
        $region75: #{reading_network_sequence.1} parent=63 // pred_region
          %v520 = vld [vmem:[#allocation2] sm:$0xff]
          %v521 = vld [vmem:[#allocation2 + $0x8] sm:$0xff]
          %vm522 = vcmask 261120
          %523 = vst.msk [vmem:[#allocation10] sm:$0xff] %vm522, %v520
          %524 = vst.msk [vmem:[#allocation10 + $0x8] sm:$0xff] %vm522, %v521
          %v525 = vld [vmem:[#allocation5] sm:$0xff]
          %v526 = vld [vmem:[#allocation5 + $0x8] sm:$0xff]
          %527 = vst.msk [vmem:[#allocation11] sm:$0xff] %vm522, %v525
          %528 = vst.msk [vmem:[#allocation11 + $0x8] sm:$0xff] %vm522, %v526
        $region76: #{reading_network_sequence.1} parent=63 // pred_fallthru
          _
        %v529 = vld [vmem:[%s511] sm:$0x3]
        %v530 = vld [vmem:[%s515] sm:$0x3]
        %v531 = vld [vmem:[%s2] sm:$0x3]
        %v532 = vld [vmem:[#allocation10] sm:$0xff]
        %v533 = vld [vmem:[#allocation10 + $0x8] sm:$0xff]
        %v534 = vld [vmem:[#allocation11] sm:$0xff]
        %v535 = vld [vmem:[#allocation11 + $0x8] sm:$0xff]
        %v536 = vld [vmem:[%s5] sm:$0xff]
        %v537 = vld [vmem:[%s5 + $0x8] sm:$0xff]
        %v538 = vld [vmem:[%s5 + $0x10] sm:$0xff]
        %v539 = vld [vmem:[%s5 + $0x18] sm:$0xff]
        %v540 = vld [vmem:[%s6] sm:$0xff]
        %v541 = vld [vmem:[%s6 + $0x8] sm:$0xff]
        %v542 = vld [vmem:[%s6 + $0x10] sm:$0xff]
        %v543 = vld [vmem:[%s6 + $0x18] sm:$0xff]
        %v546 = vrot.slane %v533, 7
        %vm547 = vcmask 1041409
        %v548 = vsel %vm547, %v546, %v532
        %vm549 = vcmask 261120
        %v550 = vsel %vm549, %v548, 0
        %552 = vmatprep.subr.mxu0 0.0
        %553 = vmatpush1.msra.mxu0 0.0
        %554 = vmatprep.subr.mxu0 0.0
        %555 = vmatpush1.msra.mxu0 0.0
        %556 = vmatprep.subr.mxu0 0.0
        %557 = vmatpush1.msra.mxu0 0.0
        %558 = vmatprep.subr.mxu0 0.0
        %559 = vmatpush1.msra.mxu0 0.0
        %560 = vmatprep.subr.mxu0 0.0
        %561 = vmatpush1.msra.mxu0 0.0
        %562 = vmatprep.subr.mxu0 0.0
        %563 = vmatpush1.msra.mxu0 0.0
        %564 = vmatprep.subr.mxu0 0.0
        %565 = vmatpush1.msra.mxu0 0.0
        %566 = vmatprep.subr.mxu0 0.0
        %567 = vmatpush1.msra.mxu0 0.0
        %568 = vmatprep.subr.mxu0 0.0
        %569 = vmatpush1.msra.mxu0 0.0
        %570 = vmatprep.subr.mxu0 0.0
        %571 = vmatpush1.msra.mxu0 0.0
        %572 = vmatprep.subr.mxu0 0.0
        %573 = vmatpush1.msra.mxu0 0.0
        %574 = vmatprep.subr.mxu0 0.0
        %575 = vmatpush1.msra.mxu0 0.0
        %576 = vmatprep.subr.mxu0 0.0
        %577 = vmatpush1.msra.mxu0 %v543
        %578 = vmatprep.subr.mxu0 0.0
        %579 = vmatpush1.msra.mxu0 %v542
        %580 = vmatprep.subr.mxu0 0.0
        %581 = vmatpush1.msra.mxu0 %v541
        %582 = vmatprep.subr.mxu0 0.0
        %583 = vmatpush1.msra.mxu0 %v540
        %584 = vmatprep.subr.mxu0 0.0
        %585 = vmatpush2.msra.mxu0 0.0
        %586 = vmatprep.subr.mxu0 0.0
        %587 = vmatpush2.msra.mxu0 0.0
        %588 = vmatprep.subr.mxu0 0.0
        %589 = vmatpush2.msra.mxu0 0.0
        %590 = vmatprep.subr.mxu0 0.0
        %591 = vmatpush2.msra.mxu0 0.0
        %592 = vmatprep.subr.mxu0 0.0
        %593 = vmatpush2.msra.mxu0 0.0
        %594 = vmatprep.subr.mxu0 0.0
        %595 = vmatpush2.msra.mxu0 0.0
        %596 = vmatprep.subr.mxu0 0.0
        %597 = vmatpush2.msra.mxu0 0.0
        %598 = vmatprep.subr.mxu0 0.0
        %599 = vmatpush2.msra.mxu0 0.0
        %600 = vmatprep.subr.mxu0 0.0
        %601 = vmatpush2.msra.mxu0 0.0
        %602 = vmatprep.subr.mxu0 0.0
        %603 = vmatpush2.msra.mxu0 0.0
        %604 = vmatprep.subr.mxu0 0.0
        %605 = vmatpush2.msra.mxu0 0.0
        %606 = vmatprep.subr.mxu0 0.0
        %607 = vmatpush2.msra.mxu0 0.0
        %608 = vmatprep.subr.mxu0 0.0
        %609 = vmatpush2.msra.mxu0 0.0
        %610 = vmatprep.subr.mxu0 0.0
        %611 = vmatpush2.msra.mxu0 0.0
        %612 = vmatprep.subr.mxu0 0.0
        %613 = vmatpush2.msra.mxu0 0.0
        %614 = vmatprep.subr.mxu0 0.0
        %615 = vmatpush2.msra.mxu0 0.0
        %616 = vmatprep.mubr.f32.mxu0 0.0
        %617 = vmatmul.mubr.f32.gmra.mxu0 %v550
        %v618 = vpop.f32.mrf.mxu0
        %v619 = vadd.f32 0.0, %v618
        %v620 = vpop.f32.mrf.mxu0
        %621 = vdwg.mxu0
        %v623 = vsel %vm549, %v529, 0
        %625 = vmatprep.subr.mxu0 0.0
        %626 = vmatpush1.msra.mxu0 0.0
        %627 = vmatprep.subr.mxu0 0.0
        %628 = vmatpush1.msra.mxu0 0.0
        %629 = vmatprep.subr.mxu0 0.0
        %630 = vmatpush1.msra.mxu0 0.0
        %631 = vmatprep.subr.mxu0 0.0
        %632 = vmatpush1.msra.mxu0 0.0
        %633 = vmatprep.subr.mxu0 0.0
        %634 = vmatpush1.msra.mxu0 0.0
        %635 = vmatprep.subr.mxu0 0.0
        %636 = vmatpush1.msra.mxu0 0.0
        %637 = vmatprep.subr.mxu0 0.0
        %638 = vmatpush1.msra.mxu0 0.0
        %639 = vmatprep.subr.mxu0 0.0
        %640 = vmatpush1.msra.mxu0 0.0
        %641 = vmatprep.subr.mxu0 0.0
        %642 = vmatpush1.msra.mxu0 0.0
        %643 = vmatprep.subr.mxu0 0.0
        %644 = vmatpush1.msra.mxu0 0.0
        %645 = vmatprep.subr.mxu0 0.0
        %646 = vmatpush1.msra.mxu0 0.0
        %647 = vmatprep.subr.mxu0 0.0
        %648 = vmatpush1.msra.mxu0 0.0
        %649 = vmatprep.subr.mxu0 0.0
        %650 = vmatpush1.msra.mxu0 %v539
        %651 = vmatprep.subr.mxu0 0.0
        %652 = vmatpush1.msra.mxu0 %v538
        %653 = vmatprep.subr.mxu0 0.0
        %654 = vmatpush1.msra.mxu0 %v537
        %655 = vmatprep.subr.mxu0 0.0
        %656 = vmatpush1.msra.mxu0 %v536
        %657 = vmatprep.subr.mxu0 0.0
        %658 = vmatpush2.msra.mxu0 0.0
        %659 = vmatprep.subr.mxu0 0.0
        %660 = vmatpush2.msra.mxu0 0.0
        %661 = vmatprep.subr.mxu0 0.0
        %662 = vmatpush2.msra.mxu0 0.0
        %663 = vmatprep.subr.mxu0 0.0
        %664 = vmatpush2.msra.mxu0 0.0
        %665 = vmatprep.subr.mxu0 0.0
        %666 = vmatpush2.msra.mxu0 0.0
        %667 = vmatprep.subr.mxu0 0.0
        %668 = vmatpush2.msra.mxu0 0.0
        %669 = vmatprep.subr.mxu0 0.0
        %670 = vmatpush2.msra.mxu0 0.0
        %671 = vmatprep.subr.mxu0 0.0
        %672 = vmatpush2.msra.mxu0 0.0
        %673 = vmatprep.subr.mxu0 0.0
        %674 = vmatpush2.msra.mxu0 0.0
        %675 = vmatprep.subr.mxu0 0.0
        %676 = vmatpush2.msra.mxu0 0.0
        %677 = vmatprep.subr.mxu0 0.0
        %678 = vmatpush2.msra.mxu0 0.0
        %679 = vmatprep.subr.mxu0 0.0
        %680 = vmatpush2.msra.mxu0 0.0
        %681 = vmatprep.subr.mxu0 0.0
        %682 = vmatpush2.msra.mxu0 0.0
        %683 = vmatprep.subr.mxu0 0.0
        %684 = vmatpush2.msra.mxu0 0.0
        %685 = vmatprep.subr.mxu0 0.0
        %686 = vmatpush2.msra.mxu0 0.0
        %687 = vmatprep.subr.mxu0 0.0
        %688 = vmatpush2.msra.mxu0 0.0
        %689 = vmatprep.mubr.f32.mxu0 0.0
        %690 = vmatmul.mubr.f32.gmra.mxu0 %v623
        %v691 = vpop.f32.mrf.mxu0
        %v692 = vadd.f32 %v619, %v691
        %v693 = vpop.f32.mrf.mxu0
        %694 = vdwg.mxu0
        %v695 = vld [vmem:[%s7] sm:$0x1]
        %v697 = vlaneseq
        %v698 = vshrl.u32 %v697, 7
        %v699 = vsub.s32 0, %v698
        %v700 = vrot.slane %v695, %v699
        %v702 = vadd.f32 %v692, %v700
        %v705 = vunpack.c.l.s4 1966171168
        %v706 = vunpack.c.0.s8 %v705
        %v707 = vlaneseq
        %v708 = vshrl.u32 %v707, 7
        %v709 = vsub.s32 %v706, %v708
        %v710 = vrot.slane %v702, %v709
        %v711 = vcombine.high %v710, %v710
        %v713 = vunpack.c.l.s4 1966171168
        %v714 = vunpack.c.0.s8 %v713
        %v715 = vlaneseq
        %v716 = vshrl.u32 %v715, 7
        %v717 = vsub.s32 %v714, %v716
        %v718 = vrot.slane %v710, %v717
        %v720 = vunpack.c.l.s4 1966171168
        %v721 = vunpack.c.0.s8 %v720
        %v722 = vlaneseq
        %v723 = vshrl.u32 %v722, 7
        %v724 = vsub.s32 %v721, %v723
        %v725 = vrot.slane %v711, %v724
        %v726 = vlaneseq
        %v727 = vshrl.u32 %v726, 7
        %v728 = vsub.s32 0, %v727
        %v729 = vrot.slane %v718, %v728
        %v730 = vlaneseq
        %v731 = vshrl.u32 %v730, 7
        %v732 = vsub.s32 0, %v731
        %v733 = vrot.slane %v725, %v732
        %v736 = vmul.f32 %v532, %v729
        %v737 = vmul.f32 %v533, %v733
        %v738 = vsel %vm549, %v736, 0.0
        %739 = vadd.xlane.f32.xlu0 %v738
        %v740 = vpop.xlane.xlu0 %739
        %v741 = vsel %vm549, %v737, 0.0
        %742 = vadd.xlane.f32.xlu0 %v741
        %v743 = vpop.xlane.xlu0 %742
        %v746 = vlaneseq
        %v747 = vand.u32 %v746, 127
        %v748 = vlaneseq
        %v749 = vshrl.u32 %v748, 7
        %v750 = vsub.s32 %v747, %v749
        %v751 = vrot.slane %v740, %v750
        %v752 = vlaneseq
        %v753 = vshrl.u32 %v752, 7
        %v754 = vsub.s32 %v747, %v753
        %v755 = vrot.slane %v743, %v754
        %v756 = vsel %vm547, %v755, %v751
        %vm758 = vcmask 58368
        %v759 = vsel %vm758, %v756, -inf
        %760 = vmax.xlane.f32.xlu0 %v759
        %v761 = vpop.xlane.xlu0 %760
        %v763 = vlaneseq
        %v764 = vshrl.u32 %v763, 7
        %v765 = vsub.s32 0, %v764
        %v766 = vrot.slane %v761, %v765
        %v767 = vlaneseq
        %v768 = vshrl.u32 %v767, 7
        %v769 = vsub.s32 1, %v768
        %v770 = vrot.slane %v761, %v769
        %v773 = vsub.f32 %v740, %v766
        %v774 = vsub.f32 %v743, %v770
        %v775 = vmul.f32 %v773, 1.442695
        %v776 = vpow.pop %v775
        %v777 = vmul.f32 %v774, 1.442695
        %v778 = vpow.pop %v777
        %v780 = vlaneseq
        %v781 = vshrl.u32 %v780, 7
        %v782 = vsub.s32 0, %v781
        %v783 = vrot.slane %v530, %v782
        %785 = vbcast.lane.b32.xlu0 %v783, 256
        %v786 = vpop.permute.xlu0 %785
        %v787 = vlaneseq
        %v788 = vshrl.u32 %v787, 7
        %v789 = vsub.s32 1, %v788
        %v790 = vrot.slane %v530, %v789
        %792 = vbcast.lane.b32.xlu0 %v790, 256
        %v793 = vpop.permute.xlu0 %792
        %v796 = vmul.f32 %v776, %v786
        %v797 = vmul.f32 %v778, %v793
        %800 = vset.pattern.permute.xlu0 0
        %801 = vperm.xlu0 %800, %v796
        %v802 = vpop.permute.xlu0 %801
        %803 = vset.pattern.permute.xlu0 0
        %804 = vperm.xlu0 %803, %v797
        %v805 = vpop.permute.xlu0 %804
        %v806 = vlaneseq
        %v807 = vshrl.u32 %v806, 7
        %v808 = vsub.s32 %v747, %v807
        %v809 = vrot.slane %v802, %v808
        %v810 = vlaneseq
        %v811 = vshrl.u32 %v810, 7
        %v812 = vsub.s32 %v747, %v811
        %v813 = vrot.slane %v805, %v812
        %v814 = vsel %vm547, %v813, %v809
        %v816 = vsel %vm758, %v814, 0.0
        %817 = vadd.xlane.f32.xlu0 %v816
        %v818 = vpop.xlane.xlu0 %817
        %v819 = vadd.f32 %v818, 1e-09
        %v820 = vrcp.pop %v819
        %v822 = vlaneseq
        %v823 = vshrl.u32 %v822, 7
        %v824 = vsub.s32 0, %v823
        %v825 = vrot.slane %v820, %v824
        %v826 = vlaneseq
        %v827 = vshrl.u32 %v826, 7
        %v828 = vsub.s32 1, %v827
        %v829 = vrot.slane %v820, %v828
        %v832 = vmul.f32 %v796, %v825
        %v833 = vmul.f32 %v797, %v829
        %835 = vset.pattern.permute.xlu0 0
        %836 = vperm.xlu0 %835, %v832
        %v837 = vpop.permute.xlu0 %836
        %840 = vset.pattern.permute.xlu0 0
        %841 = vperm.xlu0 %840, %v833
        %v842 = vpop.permute.xlu0 %841
        %v844 = vmul.f32 %v532, %v837
        %v845 = vmul.f32 %v533, %v842
        %v846 = vsel %vm549, %v844, 0.0
        %v847 = vrot.slane %v846, 4
        %v848 = vadd.f32 %v846, %v847
        %v849 = vrot.slane %v848, 2
        %v850 = vadd.f32 %v848, %v849
        %v851 = vrot.slane %v850, 1
        %v852 = vadd.f32 %v850, %v851
        %v853 = vsel %vm549, %v845, 0.0
        %v854 = vrot.slane %v853, 4
        %v855 = vadd.f32 %v853, %v854
        %v856 = vrot.slane %v855, 2
        %v857 = vadd.f32 %v855, %v856
        %v858 = vrot.slane %v857, 1
        %v859 = vadd.f32 %v857, %v858
        %v860 = vmul.f32 %v534, %v837
        %v861 = vmul.f32 %v535, %v842
        %v862 = vsel %vm549, %v860, 0.0
        %v863 = vrot.slane %v862, 4
        %v864 = vadd.f32 %v862, %v863
        %v865 = vrot.slane %v864, 2
        %v866 = vadd.f32 %v864, %v865
        %v867 = vrot.slane %v866, 1
        %v868 = vadd.f32 %v866, %v867
        %v869 = vsel %vm549, %v861, 0.0
        %v870 = vrot.slane %v869, 4
        %v871 = vadd.f32 %v869, %v870
        %v872 = vrot.slane %v871, 2
        %v873 = vadd.f32 %v871, %v872
        %v874 = vrot.slane %v873, 1
        %v875 = vadd.f32 %v873, %v874
        %v877 = vrot.slane %v531, 1
        %v880 = vmul.f32 %v852, %v531
        %v881 = vmul.f32 %v859, %v877
        %v882 = vld [vmem:[%s8] sm:$0xff]
        %v883 = vld [vmem:[%s8 + $0x8] sm:$0xff]
        %v884 = vld [vmem:[%s8 + $0x10] sm:$0xff]
        %v885 = vld [vmem:[%s8 + $0x18] sm:$0xff]
        %v886 = vld [vmem:[%s9] sm:$0xff]
        %v887 = vld [vmem:[%s9 + $0x8] sm:$0xff]
        %v888 = vld [vmem:[%s9 + $0x10] sm:$0xff]
        %v889 = vld [vmem:[%s9 + $0x18] sm:$0xff]
        %v892 = vrot.slane %v881, 7
        %v893 = vsel %vm547, %v892, %v880
        %v894 = vsel %vm549, %v893, 0
        %896 = vmatprep.subr.mxu0 0.0
        %897 = vmatpush1.msra.mxu0 0.0
        %898 = vmatprep.subr.mxu0 0.0
        %899 = vmatpush1.msra.mxu0 0.0
        %900 = vmatprep.subr.mxu0 0.0
        %901 = vmatpush1.msra.mxu0 0.0
        %902 = vmatprep.subr.mxu0 0.0
        %903 = vmatpush1.msra.mxu0 0.0
        %904 = vmatprep.subr.mxu0 0.0
        %905 = vmatpush1.msra.mxu0 0.0
        %906 = vmatprep.subr.mxu0 0.0
        %907 = vmatpush1.msra.mxu0 0.0
        %908 = vmatprep.subr.mxu0 0.0
        %909 = vmatpush1.msra.mxu0 0.0
        %910 = vmatprep.subr.mxu0 0.0
        %911 = vmatpush1.msra.mxu0 0.0
        %912 = vmatprep.subr.mxu0 0.0
        %913 = vmatpush1.msra.mxu0 0.0
        %914 = vmatprep.subr.mxu0 0.0
        %915 = vmatpush1.msra.mxu0 0.0
        %916 = vmatprep.subr.mxu0 0.0
        %917 = vmatpush1.msra.mxu0 0.0
        %918 = vmatprep.subr.mxu0 0.0
        %919 = vmatpush1.msra.mxu0 0.0
        %920 = vmatprep.subr.mxu0 0.0
        %921 = vmatpush1.msra.mxu0 %v889
        %922 = vmatprep.subr.mxu0 0.0
        %923 = vmatpush1.msra.mxu0 %v888
        %924 = vmatprep.subr.mxu0 0.0
        %925 = vmatpush1.msra.mxu0 %v887
        %926 = vmatprep.subr.mxu0 0.0
        %927 = vmatpush1.msra.mxu0 %v886
        %928 = vmatprep.subr.mxu0 0.0
        %929 = vmatpush2.msra.mxu0 0.0
        %930 = vmatprep.subr.mxu0 0.0
        %931 = vmatpush2.msra.mxu0 0.0
        %932 = vmatprep.subr.mxu0 0.0
        %933 = vmatpush2.msra.mxu0 0.0
        %934 = vmatprep.subr.mxu0 0.0
        %935 = vmatpush2.msra.mxu0 0.0
        %936 = vmatprep.subr.mxu0 0.0
        %937 = vmatpush2.msra.mxu0 0.0
        %938 = vmatprep.subr.mxu0 0.0
        %939 = vmatpush2.msra.mxu0 0.0
        %940 = vmatprep.subr.mxu0 0.0
        %941 = vmatpush2.msra.mxu0 0.0
        %942 = vmatprep.subr.mxu0 0.0
        %943 = vmatpush2.msra.mxu0 0.0
        %944 = vmatprep.subr.mxu0 0.0
        %945 = vmatpush2.msra.mxu0 0.0
        %946 = vmatprep.subr.mxu0 0.0
        %947 = vmatpush2.msra.mxu0 0.0
        %948 = vmatprep.subr.mxu0 0.0
        %949 = vmatpush2.msra.mxu0 0.0
        %950 = vmatprep.subr.mxu0 0.0
        %951 = vmatpush2.msra.mxu0 0.0
        %952 = vmatprep.subr.mxu0 0.0
        %953 = vmatpush2.msra.mxu0 0.0
        %954 = vmatprep.subr.mxu0 0.0
        %955 = vmatpush2.msra.mxu0 0.0
        %956 = vmatprep.subr.mxu0 0.0
        %957 = vmatpush2.msra.mxu0 0.0
        %958 = vmatprep.subr.mxu0 0.0
        %959 = vmatpush2.msra.mxu0 0.0
        %960 = vmatprep.mubr.f32.mxu0 0.0
        %961 = vmatmul.mubr.f32.gmra.mxu0 %v894
        %v962 = vpop.f32.mrf.mxu0
        %v963 = vadd.f32 0.0, %v962
        %v964 = vpop.f32.mrf.mxu0
        %965 = vdwg.mxu0
        %966 = vmatprep.subr.mxu0 0.0
        %967 = vmatpush1.msra.mxu0 0.0
        %968 = vmatprep.subr.mxu0 0.0
        %969 = vmatpush1.msra.mxu0 0.0
        %970 = vmatprep.subr.mxu0 0.0
        %971 = vmatpush1.msra.mxu0 0.0
        %972 = vmatprep.subr.mxu0 0.0
        %973 = vmatpush1.msra.mxu0 0.0
        %974 = vmatprep.subr.mxu0 0.0
        %975 = vmatpush1.msra.mxu0 0.0
        %976 = vmatprep.subr.mxu0 0.0
        %977 = vmatpush1.msra.mxu0 0.0
        %978 = vmatprep.subr.mxu0 0.0
        %979 = vmatpush1.msra.mxu0 0.0
        %980 = vmatprep.subr.mxu0 0.0
        %981 = vmatpush1.msra.mxu0 0.0
        %982 = vmatprep.subr.mxu0 0.0
        %983 = vmatpush1.msra.mxu0 0.0
        %984 = vmatprep.subr.mxu0 0.0
        %985 = vmatpush1.msra.mxu0 0.0
        %986 = vmatprep.subr.mxu0 0.0
        %987 = vmatpush1.msra.mxu0 0.0
        %988 = vmatprep.subr.mxu0 0.0
        %989 = vmatpush1.msra.mxu0 0.0
        %990 = vmatprep.subr.mxu0 0.0
        %991 = vmatpush1.msra.mxu0 %v885
        %992 = vmatprep.subr.mxu0 0.0
        %993 = vmatpush1.msra.mxu0 %v884
        %994 = vmatprep.subr.mxu0 0.0
        %995 = vmatpush1.msra.mxu0 %v883
        %996 = vmatprep.subr.mxu0 0.0
        %997 = vmatpush1.msra.mxu0 %v882
        %998 = vmatprep.subr.mxu0 0.0
        %999 = vmatpush2.msra.mxu0 0.0
        %1000 = vmatprep.subr.mxu0 0.0
        %1001 = vmatpush2.msra.mxu0 0.0
        %1002 = vmatprep.subr.mxu0 0.0
        %1003 = vmatpush2.msra.mxu0 0.0
        %1004 = vmatprep.subr.mxu0 0.0
        %1005 = vmatpush2.msra.mxu0 0.0
        %1006 = vmatprep.subr.mxu0 0.0
        %1007 = vmatpush2.msra.mxu0 0.0
        %1008 = vmatprep.subr.mxu0 0.0
        %1009 = vmatpush2.msra.mxu0 0.0
        %1010 = vmatprep.subr.mxu0 0.0
        %1011 = vmatpush2.msra.mxu0 0.0
        %1012 = vmatprep.subr.mxu0 0.0
        %1013 = vmatpush2.msra.mxu0 0.0
        %1014 = vmatprep.subr.mxu0 0.0
        %1015 = vmatpush2.msra.mxu0 0.0
        %1016 = vmatprep.subr.mxu0 0.0
        %1017 = vmatpush2.msra.mxu0 0.0
        %1018 = vmatprep.subr.mxu0 0.0
        %1019 = vmatpush2.msra.mxu0 0.0
        %1020 = vmatprep.subr.mxu0 0.0
        %1021 = vmatpush2.msra.mxu0 0.0
        %1022 = vmatprep.subr.mxu0 0.0
        %1023 = vmatpush2.msra.mxu0 0.0
        %1024 = vmatprep.subr.mxu0 0.0
        %1025 = vmatpush2.msra.mxu0 0.0
        %1026 = vmatprep.subr.mxu0 0.0
        %1027 = vmatpush2.msra.mxu0 0.0
        %1028 = vmatprep.subr.mxu0 0.0
        %1029 = vmatpush2.msra.mxu0 0.0
        %1030 = vmatprep.mubr.f32.mxu0 0.0
        %1031 = vmatmul.mubr.f32.gmra.mxu0 %v623
        %v1032 = vpop.f32.mrf.mxu0
        %v1033 = vadd.f32 %v963, %v1032
        %v1034 = vpop.f32.mrf.mxu0
        %1035 = vdwg.mxu0
        %v1036 = vld [vmem:[%s10] sm:$0x1]
        %v1038 = vlaneseq
        %v1039 = vshrl.u32 %v1038, 7
        %v1040 = vsub.s32 0, %v1039
        %v1041 = vrot.slane %v1036, %v1040
        %v1043 = vadd.f32 %v1033, %v1041
        %v1044 = vxor.u32 %v1043, 2147483648
        %v1045 = vmul.f32 %v1044, 1.442695
        %v1046 = vpow.pop %v1045
        %v1047 = vadd.f32 %v1046, 1.0
        %v1048 = vrcp.pop %v1047
        %v1049 = vmul.f32 1.0, %v1048
        %v1050 = vtanh.pop %v1043
        %v1053 = vsel %vm547, %v875, %v868
        %1054 = vrot.lane.b32.xlu0 %v1053, 32
        %v1055 = vpop.permute.xlu0 %1054
        %v1057 = vmul.f32 %v1049, %v1055
        %1059 = vrot.lane.b32.xlu0 %v1050, 64
        %v1060 = vpop.permute.xlu0 %1059
        %v1062 = vmul.f32 %v1049, %v1060
        %1064 = vrot.lane.b32.xlu0 %v1062, 32
        %v1065 = vpop.permute.xlu0 %1064
        %v1067 = vadd.f32 %v1057, %v1065
        %v1068 = vtanh.pop %v1067
        %1070 = vrot.lane.b32.xlu0 %v1068, 64
        %v1071 = vpop.permute.xlu0 %1070
        %v1073 = vmul.f32 %v1049, %v1071
        %1075 = vrot.lane.b32.xlu0 %v1073, 32
        %v1076 = vpop.permute.xlu0 %1075
        %vm1078 = vcmask 254976
        %1079 = vst.msk [vmem:[%s496] sm:$0x3] %vm1078, %v1076
        %v1080 = vlaneseq
        %v1081 = vshrl.u32 %v1080, 7
        %v1082 = vsub.s32 %v747, %v1081
        %v1083 = vrot.slane %v837, %v1082
        %v1084 = vlaneseq
        %v1085 = vshrl.u32 %v1084, 7
        %v1086 = vsub.s32 %v747, %v1085
        %v1087 = vrot.slane %v842, %v1086
        %v1088 = vsel %vm547, %v1087, %v1083
        %1090 = vst.msk [vmem:[%s503] sm:$0x3] %vm758, %v1088
        %vm1091 = vcmask 260096
        %1092 = vst.msk [vmem:[#allocation10 + $0x1] sm:$0x7f] %vm1091, %v532
        %1093 = vst.msk [vmem:[#allocation10 + $0x9] sm:$0x7f] %vm1091, %v533
        %1094 = vst.msk [vmem:[#allocation11 + $0x1] sm:$0x7f] %vm1091, %v534
        %1095 = vst.msk [vmem:[#allocation11 + $0x9] sm:$0x7f] %vm1091, %v535
        %v1097 = vunpack.c.l.s4 1966171168
        %v1098 = vunpack.c.0.s8 %v1097
        %v1099 = vlaneseq
        %v1100 = vshrl.u32 %v1099, 7
        %v1101 = vsub.s32 %v1098, %v1100
        %v1102 = vrot.slane %v1073, %v1101
        %v1103 = vcombine.high %v1102, %v1102
        %v1105 = vunpack.c.l.s4 1966171168
        %v1106 = vunpack.c.0.s8 %v1105
        %v1107 = vlaneseq
        %v1108 = vshrl.u32 %v1107, 7
        %v1109 = vsub.s32 %v1106, %v1108
        %v1110 = vrot.slane %v1102, %v1109
        %v1112 = vunpack.c.l.s4 1966171168
        %v1113 = vunpack.c.0.s8 %v1112
        %v1114 = vlaneseq
        %v1115 = vshrl.u32 %v1114, 7
        %v1116 = vsub.s32 %v1113, %v1115
        %v1117 = vrot.slane %v1103, %v1116
        %v1118 = vlaneseq
        %v1119 = vshrl.u32 %v1118, 7
        %v1120 = vsub.s32 0, %v1119
        %v1121 = vrot.slane %v1110, %v1120
        %v1122 = vlaneseq
        %v1123 = vshrl.u32 %v1122, 7
        %v1124 = vsub.s32 0, %v1123
        %v1125 = vrot.slane %v1117, %v1124
        %1126 = vrot.lane.b32.xlu0 %v1121, 32
        %v1127 = vpop.permute.xlu0 %1126
        %1128 = vrot.lane.b32.xlu0 %v1125, 32
        %v1129 = vpop.permute.xlu0 %1128
        %vm1132 = vcmask 253952
        %1133 = vst.msk [vmem:[#allocation10] sm:$0x1] %vm1132, %v1127
        %1134 = vst.msk [vmem:[#allocation10 + $0x8] sm:$0x1] %vm1132, %v1129
        %v1137 = vunpack.c.l.s4 1966171168
        %v1138 = vunpack.c.0.s8 %v1137
        %v1139 = vlaneseq
        %v1140 = vshrl.u32 %v1139, 7
        %v1141 = vsub.s32 %v1138, %v1140
        %v1142 = vrot.slane %v1067, %v1141
        %v1143 = vcombine.high %v1142, %v1142
        %v1145 = vunpack.c.l.s4 1966171168
        %v1146 = vunpack.c.0.s8 %v1145
        %v1147 = vlaneseq
        %v1148 = vshrl.u32 %v1147, 7
        %v1149 = vsub.s32 %v1146, %v1148
        %v1150 = vrot.slane %v1142, %v1149
        %v1152 = vunpack.c.l.s4 1966171168
        %v1153 = vunpack.c.0.s8 %v1152
        %v1154 = vlaneseq
        %v1155 = vshrl.u32 %v1154, 7
        %v1156 = vsub.s32 %v1153, %v1155
        %v1157 = vrot.slane %v1143, %v1156
        %v1158 = vlaneseq
        %v1159 = vshrl.u32 %v1158, 7
        %v1160 = vsub.s32 0, %v1159
        %v1161 = vrot.slane %v1150, %v1160
        %v1162 = vlaneseq
        %v1163 = vshrl.u32 %v1162, 7
        %v1164 = vsub.s32 0, %v1163
        %v1165 = vrot.slane %v1157, %v1164
        %1166 = vrot.lane.b32.xlu0 %v1161, 96
        %v1167 = vpop.permute.xlu0 %1166
        %1168 = vrot.lane.b32.xlu0 %v1165, 96
        %v1169 = vpop.permute.xlu0 %1168
        %1172 = vst.msk [vmem:[#allocation11] sm:$0x1] %vm1132, %v1167
        %1173 = vst.msk [vmem:[#allocation11 + $0x8] sm:$0x1] %vm1132, %v1169
        %s1174 = sand.u32 %s284, 1
        %s1175 = scalar_lea.sflag [#allocation4], %s1174
        %s1176 = sand.u32 %s284, 1
        %s1177 = smul.addr %s1176, 2
        %s1178 = scalar_lea.vmem [#allocation7], %s1177
        %s1179 = sand.u32 %s35, 1
        %s1180 = scalar_lea.sflag [#allocation9], %s1179
        %s1181 = sand.u32 %s310, 1
        %s1182 = smul.addr %s1181, 2
        %s1183 = scalar_lea.vmem [#allocation8], %s1182
        // Predicated region
        $region77: #{reading_network_sequence.1} parent=63 // pred_check
          %p1184 = pneg %p294
        $region78: #{reading_network_sequence.1} parent=63 // pred_check_branch
          %1186 = sbr.rel (%p1184) target = $region80
        $region79: #{reading_network_sequence.1} parent=63 // pred_region
          %s1188 = ssub.s32 32, 32
          %1189 = vsyncadd %s1175, %s1188
          %s1190 = smul.addr %s35, 32
          %s1191 = scalar_lea.hbm %s11, %s1190
          %s1193 = sshll.u32 %s1178, 4
          %s1194 = int_to_ptr.vmem [resolvable:$true] %s1193
          %1196 = dma.vmem_to_hbm [thread:$0]  %s1194, 32, %s1191, %s1175
        $region80: #{reading_network_sequence.1} parent=63 // pred_fallthru
          _
        // Predicated region
        $region81: #{reading_network_sequence.1} parent=63 // pred_check
          %p1197 = pneg %p320
        $region82: #{reading_network_sequence.1} parent=63 // pred_check_branch
          %1199 = sbr.rel (%p1197) target = $region84
        $region83: #{reading_network_sequence.1} parent=63 // pred_region
          %s1201 = ssub.s32 32, 32
          %1202 = vsyncadd %s1180, %s1201
          %s1203 = smul.addr %s35, 32
          %s1204 = scalar_lea.hbm %s12, %s1203
          %s1206 = sshll.u32 %s1183, 4
          %s1207 = int_to_ptr.vmem [resolvable:$true] %s1206
          %1209 = dma.vmem_to_hbm [thread:$0]  %s1207, 32, %s1204, %s1180
        $region84: #{reading_network_sequence.1} parent=63 // pred_fallthru
          _
        // Predicated region
        $region85: #{reading_network_sequence.1} parent=63 // pred_check
          %p1210 = pneg %p341
        $region86: #{reading_network_sequence.1} parent=63 // pred_check_branch
          %1212 = sbr.rel (%p1210) target = $region88
        $region87: #{reading_network_sequence.1} parent=63 // pred_region
          %s1214 = ssub.s32 256, 256
          %1215 = vsyncadd [#allocation9], %s1214
          %s1216 = sshll.u32 [#allocation10], 4
          %s1217 = int_to_ptr.vmem [resolvable:$true] %s1216
          %1222 = dma.vmem_to_hbm [thread:$0]  %s1217, 256, %s13, [#allocation9], 128, 128, 8
        $region88: #{reading_network_sequence.1} parent=63 // pred_fallthru
          _
        // Predicated region
        $region89: #{reading_network_sequence.1} parent=63 // pred_check
          %p1223 = pneg %p362
        $region90: #{reading_network_sequence.1} parent=63 // pred_check_branch
          %1225 = sbr.rel (%p1223) target = $region92
        $region91: #{reading_network_sequence.1} parent=63 // pred_region
          %s1227 = ssub.s32 256, 256
          %1228 = vsyncadd [#allocation12], %s1227
          %s1229 = sshll.u32 [#allocation11], 4
          %s1230 = int_to_ptr.vmem [resolvable:$true] %s1229
          %1235 = dma.vmem_to_hbm [thread:$0]  %s1230, 256, %s14, [#allocation12], 128, 128, 8
        $region92: #{reading_network_sequence.1} parent=63 // pred_fallthru
          _
        // Predicated region
        $region93: #{reading_network_sequence.1} parent=63 // pred_check
          %p1236 = pneg %p341
        $region94: #{reading_network_sequence.1} parent=63 // pred_check_branch
          %1238 = sbr.rel (%p1236) target = $region96
        $region95: #{reading_network_sequence.1} parent=63 // pred_region
          %1239 = dma.done [#allocation9], 256
        $region96: #{reading_network_sequence.1} parent=63 // pred_fallthru
          _
        // Predicated region
        $region97: #{reading_network_sequence.1} parent=63 // pred_check
          %p1240 = pneg %p362
        $region98: #{reading_network_sequence.1} parent=63 // pred_check_branch
          %1242 = sbr.rel (%p1240) target = $region100
        $region99: #{reading_network_sequence.1} parent=63 // pred_region
          %1243 = dma.done [#allocation12], 256
        $region100: #{reading_network_sequence.1} parent=63 // pred_fallthru
          _
      $region64: #{reading_network_sequence.1} parent=5 // pred_fallthru
        _
      %p1244 = scmp.le.s32.totalorder 2, %s30
      // Predicated region
      $region101: #{reading_network_sequence.1} parent=5 // pred_check
        %p1245 = pneg %p1244
      $region102: #{reading_network_sequence.1} parent=5 // pred_check_branch
        %1247 = sbr.rel (%p1245) target = $region104
      $region103: #{reading_network_sequence.1} parent=5 // pred_region
        %s1248 = ssub.s32 %s30, 2
        // Predicated region
        $region105: #{reading_network_sequence.1} parent=103 // pred_check
          %p1249 = pneg %p300
        $region106: #{reading_network_sequence.1} parent=103 // pred_check_branch
          %1251 = sbr.rel (%p1249) target = $region108
        $region107: #{reading_network_sequence.1} parent=103 // pred_region
          %s1252 = sand.u32 %s285, 1
          %s1253 = scalar_lea.sflag [#allocation4], %s1252
          %s1254 = sand.u32 %s285, 1
          %s1255 = smul.addr %s1254, 2
          %s1256 = scalar_lea.vmem [#allocation7], %s1255
          %1257 = dma.done %s1253, 32
        $region108: #{reading_network_sequence.1} parent=103 // pred_fallthru
          _
        // Predicated region
        $region109: #{reading_network_sequence.1} parent=103 // pred_check
          %p1258 = pneg %p326
        $region110: #{reading_network_sequence.1} parent=103 // pred_check_branch
          %1260 = sbr.rel (%p1258) target = $region112
        $region111: #{reading_network_sequence.1} parent=103 // pred_region
          %s1261 = sand.u32 %s36, 1
          %s1262 = scalar_lea.sflag [#allocation9], %s1261
          %s1263 = sand.u32 %s311, 1
          %s1264 = smul.addr %s1263, 2
          %s1265 = scalar_lea.vmem [#allocation8], %s1264
          %1266 = dma.done %s1262, 32
        $region112: #{reading_network_sequence.1} parent=103 // pred_fallthru
          _
      $region104: #{reading_network_sequence.1} parent=5 // pred_fallthru
        _
    $region6: #{reading_network_sequence.1} parent=1 // loop_footer
      %s34 = sadd.s32 1, %s30
    $region7: #{reading_network_sequence.1} parent=1 // loop_footer_branch
      %29 = sbr.rel target = $region3
    $region8: #{reading_network_sequence.1} parent=1 // loop_exit
      _
    %1267 = vsyncpa [#allocation3], 1
    %s1268 = scalar_lea.sflag [#allocation3], 1
    %1269 = vsyncpa %s1268, 1
    %1270 = vsyncpa [#allocation6], 1
    %1271 = vsyncpa [#allocation4], 1
    %s1272 = scalar_lea.sflag [#allocation4], 1
    %1273 = vsyncpa %s1272, 1
    %1274 = vsyncpa [#allocation9], 1
    %s1275 = scalar_lea.sflag [#allocation9], 1
    %1276 = vsyncpa %s1275, 1
    %1277 = vsyncpa [#allocation12], 1

</llo_original>
